<compile_context>
chip_gen: v7x
topology: tpu7x:2x2x1
jax: 0.10.0
libtpu: 0.0.40
codegen_flags: <defaults>
</compile_context>

<pallas_src>
import functools
import math

import jax
import jax.numpy as jnp
from jax.experimental import pallas as pl
from jax.experimental.pallas import tpu as pltpu


def _round_up(n, m):
    return ((n + m - 1) // m) * m


def _vmem_capacity_bytes():
    """Per-TensorCore VMEM capacity (generation aware), with a safe fallback."""
    try:
        cap = int(getattr(pltpu.get_tpu_info(), "vmem_capacity_bytes", 0))
        if cap > 0:
            return cap
    except Exception:
        pass
    return 64 << 20  # conservative default (v7x per-core VMEM)


def precompute_graph(a0, a1, deg0, deg1):
    """Graph-static preprocessing (hoist/cache this when the graph is fixed).

    Returns:
      adiff: bf16 [N,N]  = D0^{-1/2} A0 D0^{-1/2} - D1^{-1/2} A1 D1^{-1/2}
      coef:  f32  [N,1]  = 0.01 / (D0 + D1)   (zero-degree guarded)
    """
    dinv0 = jnp.where(deg0 > 0, deg0 ** -0.5, 0.0).astype(jnp.float32)
    dinv1 = jnp.where(deg1 > 0, deg1 ** -0.5, 0.0).astype(jnp.float32)
    adiff = ((dinv0 * a0) * dinv0.T - (dinv1 * a1) * dinv1.T).astype(jnp.bfloat16)
    dsum = (deg0 + deg1).astype(jnp.float32)
    coef = jnp.where(dsum > 0, 0.01 / dsum, 0.0).astype(jnp.float32)
    return adiff, coef


# ----------------------------------------------------------------------------
# Fused whole-graph kernel (transposed layout): MLP + all prop steps in one
# pallas_call.  Valid whenever bf16 Adiff + features + weights fit in VMEM.
# ----------------------------------------------------------------------------
def _fused_kernel(xt_ref, w1t_ref, scale_ref, shift_ref, w2t_ref,
                  adiff_ref, coef_ref, o_ref, *, prop_step):
    # MLP in feature-major layout: zT = W1^T x^T ; hT = W2^T relu(BN(z))^T
    zt = jnp.dot(w1t_ref[...], xt_ref[...], preferred_element_type=jnp.float32)
    zt = jnp.maximum(zt * scale_ref[...] + shift_ref[...], 0.0)       # (H, N)
    ht = jnp.dot(w2t_ref[...], zt, preferred_element_type=jnp.float32)  # (H, N)

    # Propagation (Adiff symmetric):  yT = hT @ Adiff  <=>  y = Adiff @ h,
    # giving an N-wide MXU output instead of H=128-wide.
    coef = coef_ref[...]                    # (1, N): 0.01/(D0+D1), guarded
    keep = 1.0 - coef
    oric = ht * coef                        # constant across steps (hoisted)
    adiff = adiff_ref[...]                  # bf16, resident in VMEM

    for _ in range(prop_step):              # small static constant -> unrolled
        yt = jnp.dot(ht.astype(jnp.bfloat16), adiff,
                     preferred_element_type=jnp.float32)
        ht = ht * keep + oric + yt
    o_ref[...] = ht                         # (H, N); wrapper transposes back


def yinyan_fused(x, w1, scale, shift, w2, adiff_bf16, coef, prop_step, vmem_cap):
    N = x.shape[0]
    H = w2.shape[1]
    xt = x.T
    w1t = w1.T
    w2t = w2.T
    scale_c = scale.reshape(-1, 1)
    shift_c = shift.reshape(-1, 1)
    coef_r = coef.reshape(1, -1)

    resident = ((xt.size + w1t.size + w2t.size + scale_c.size + shift_c.size
                 + coef_r.size + 3 * H * N) * 4 + adiff_bf16.size * 2)
    vmem_limit = int(min(vmem_cap, max(32 << 20, resident + (16 << 20))))
    vmem = pl.BlockSpec(memory_space=pltpu.MemorySpace.VMEM)

    out_t = pl.pallas_call(
        functools.partial(_fused_kernel, prop_step=prop_step),
        out_shape=jax.ShapeDtypeStruct((H, N), jnp.float32),
        in_specs=[vmem] * 7,
        out_specs=vmem,
        compiler_params=pltpu.CompilerParams(vmem_limit_bytes=vmem_limit),
    )(xt, w1t, scale_c, shift_c, w2t, adiff_bf16, coef_r)
    return out_t.T


# ----------------------------------------------------------------------------
# Tiled fallback (graphs too large for the fused path).
# ----------------------------------------------------------------------------
def _mlp_kernel(x_ref, w1_ref, scale_ref, shift_ref, w2_ref, o_ref):
    z = jnp.dot(x_ref[...], w1_ref[...], preferred_element_type=jnp.float32)
    z = jnp.maximum(z * scale_ref[...] + shift_ref[...], 0.0)
    o_ref[...] = jnp.dot(z, w2_ref[...], preferred_element_type=jnp.float32)


def mlp_pallas(x, w1, scale, shift, w2, tm, vmem_cap):
    N, fin = x.shape
    H = w1.shape[1]
    assert N % tm == 0, "caller pads N to a multiple of the row tile"
    scale_r = scale.reshape(1, -1)
    shift_r = shift.reshape(1, -1)
    resident = (2 * (tm * fin + tm * H) * 4
                + (fin * H + H * H + 2 * H) * 4)
    vmem_limit = int(min(vmem_cap, max(32 << 20, resident + (16 << 20))))
    return pl.pallas_call(
        _mlp_kernel,
        out_shape=jax.ShapeDtypeStruct((N, H), jnp.float32),
        grid=(N // tm,),
        in_specs=[
            pl.BlockSpec((tm, fin), lambda i: (i, 0)),   # x row tile
            pl.BlockSpec((fin, H), lambda i: (0, 0)),    # W1 (resident)
            pl.BlockSpec((1, H), lambda i: (0, 0)),      # BN scale
            pl.BlockSpec((1, H), lambda i: (0, 0)),      # BN shift
            pl.BlockSpec((H, H), lambda i: (0, 0)),      # W2 (resident)
        ],
        out_specs=pl.BlockSpec((tm, H), lambda i: (i, 0)),
        compiler_params=pltpu.CompilerParams(
            dimension_semantics=("parallel",),
            vmem_limit_bytes=vmem_limit),
    )(x, w1, scale_r, shift_r, w2)


def _prop_tiled_kernel(h_ref, keep_ref, oric_ref, adiff_ref, o_ref, acc_ref,
                       *, tm, tk):
    i = pl.program_id(0)
    k = pl.program_id(1)

    @pl.when(k == 0)
    def _():
        # base = h*(1-coef) + ori*coef, computed in-kernel (no XLA glue).
        row = h_ref[pl.ds(pl.multiple_of(i * tm, tm), tm), :]
        acc_ref[...] = row * keep_ref[...] + oric_ref[...]

    # h is fully VMEM-resident; slice the k-panel and cast to bf16 in-kernel.
    hk = h_ref[pl.ds(pl.multiple_of(k * tk, tk), tk), :].astype(jnp.bfloat16)
    acc_ref[...] += jnp.dot(adiff_ref[...], hk,
                            preferred_element_type=jnp.float32)

    @pl.when(k == pl.num_programs(1) - 1)
    def _():
        o_ref[...] = acc_ref[...]


def prop_step_tiled(h, keep, oric, adiff_bf16, tm, tk, vmem_cap):
    Np, H = h.shape
    assert Np % tm == 0 and Np % tk == 0
    resident = (2 * Np * H * 4                 # resident f32 h
                + 2 * (tm * 1 + tm * H) * 4    # keep / oric row tiles
                + 2 * tm * tk * 2              # Adiff tiles (bf16, dbl-buffered)
                + 2 * tm * H * 4               # output row tiles
                + tm * H * 4)                  # accumulator scratch
    vmem_limit = int(min(vmem_cap, max(32 << 20, resident + (16 << 20))))
    return pl.pallas_call(
        functools.partial(_prop_tiled_kernel, tm=tm, tk=tk),
        out_shape=jax.ShapeDtypeStruct((Np, H), jnp.float32),
        grid=(Np // tm, Np // tk),
        in_specs=[
            pl.BlockSpec((Np, H), lambda i, k: (0, 0)),   # h: fully VMEM-resident
            pl.BlockSpec((tm, 1), lambda i, k: (i, 0)),   # 1 - coef (row tile)
            pl.BlockSpec((tm, H), lambda i, k: (i, 0)),   # ori*coef (row tile)
            pl.BlockSpec((tm, tk), lambda i, k: (i, k)),  # Adiff tile (bf16)
        ],
        out_specs=pl.BlockSpec((tm, H), lambda i, k: (i, 0)),
        scratch_shapes=[pltpu.VMEM((tm, H), jnp.float32)],
        compiler_params=pltpu.CompilerParams(
            dimension_semantics=("parallel", "arbitrary"),  # rows across TCs
            vmem_limit_bytes=vmem_limit),
    )(h, keep, oric, adiff_bf16)


# ----------------------------------------------------------------------------
# Forward wrapper
# ----------------------------------------------------------------------------
def yinyan_forward(x, w1, w2, gamma, beta, run_mean, run_var,
                   a0=None, a1=None, deg0=None, deg1=None,
                   prop_step=2, eps=1e-5, force_tiled=False,
                   tm=512, tk=1024, precomputed=None):
    # Fold eval-mode BatchNorm1d into per-feature scale/shift (glue, plain JAX).
    inv_std = 1.0 / jnp.sqrt(run_var + eps)
    scale = (gamma * inv_std).astype(jnp.float32)
    shift = (beta - run_mean * gamma * inv_std).astype(jnp.float32)

    if precomputed is None:
        adiff, coef = precompute_graph(a0, a1, deg0, deg1)
    else:
        adiff, coef = precomputed

    N = x.shape[0]
    H = w2.shape[1]
    cap = _vmem_capacity_bytes()

    # Single-call fused path whenever everything comfortably fits this
    # generation's VMEM (~112 MiB resident on v5e/v6e, ~48 MiB on v7x).
    fused_need = (N * N * 2
                  + (x.size + w1.size + w2.size + 2 * H + N) * 4
                  + 4 * N * H * 4)
    if (not force_tiled) and fused_need + (16 << 20) <= cap:
        return yinyan_fused(x, w1, scale, shift, w2, adiff, coef,
                            prop_step, cap)

    # ---- tiled fallback ------------------------------------------------------
    nr = _round_up(N, 128)
    tm = max(128, min(tm, nr))
    tk = max(128, min(tk, nr))
    Np = _round_up(N, math.lcm(tm, tk))
    pad = Np - N
    if pad:
        # zero-padded rows/cols: padded Adiff cols are 0 so they never leak in.
        x = jnp.pad(x, ((0, pad), (0, 0)))
        adiff = jnp.pad(adiff, ((0, pad), (0, pad)))
        coef = jnp.pad(coef, ((0, pad), (0, 0)))

    h = mlp_pallas(x, w1, scale, shift, w2, tm=tm, vmem_cap=cap)
    keep = 1.0 - coef                      # (Np, 1); step-invariant
    oric = h * coef                        # (Np, H); one XLA pass total
    for _ in range(prop_step):
        h = prop_step_tiled(h, keep, oric, adiff, tm, tk, vmem_cap=cap)
    return h[:N]


# ----------------------------------------------------------------------------
# demo / check
# ----------------------------------------------------------------------------
if __name__ == "__main__":
    N, IN_FEATS, HIDDEN, PROP_STEP = 256, 32, 128, 2

    key = jax.random.PRNGKey(0)
    ks = jax.random.split(key, 10)

    x = jax.random.normal(ks[0], (N, IN_FEATS), jnp.float32)
    # Linear weights stored as [in, out] (== torch W.T), bias=False.
    w1 = 0.1 * jax.random.normal(ks[1], (IN_FEATS, HIDDEN), jnp.float32)
    w2 = 0.1 * jax.random.normal(ks[2], (HIDDEN, HIDDEN), jnp.float32)
    # BatchNorm1d parameters / running stats (eval mode).
    gamma = 1.0 + 0.1 * jax.random.normal(ks[3], (HIDDEN,), jnp.float32)
    beta = 0.1 * jax.random.normal(ks[4], (HIDDEN,), jnp.float32)
    run_mean = 0.1 * jax.random.normal(ks[5], (HIDDEN,), jnp.float32)
    run_var = 0.5 + jnp.abs(jax.random.normal(ks[6], (HIDDEN,), jnp.float32))

    # Synthetic bidirected graphs g / neg_g: symmetric {0,1}, no self loops.
    eye = jnp.eye(N, dtype=jnp.float32)
    u0 = jax.random.uniform(ks[7], (N, N))
    a0 = ((u0 + u0.T) > 1.0).astype(jnp.float32) * (1.0 - eye)
    u1 = jax.random.uniform(ks[8], (N, N))
    a1 = ((u1 + u1.T) > 1.2).astype(jnp.float32) * (1.0 - eye)
    deg0 = a0.sum(axis=1, keepdims=True)   # g.ndata['deg']     -> (N, 1)
    deg1 = a1.sum(axis=1, keepdims=True)   # neg_g.ndata['deg'] -> (N, 1)

    # Graph-static preprocessing done once (cache across forwards).
    pre = precompute_graph(a0, a1, deg0, deg1)

    # Fused single-call path (auto-selected at this size).
    out_fused = yinyan_forward(x, w1, w2, gamma, beta, run_mean, run_var,
                               a0, a1, deg0, deg1, prop_step=PROP_STEP,
                               precomputed=pre)
    out_fused = jax.block_until_ready(out_fused)

    # Tiled fallback path (forced, small tiles to exercise the 2-D grid).
    out_tiled = yinyan_forward(x, w1, w2, gamma, beta, run_mean, run_var,
                               a0, a1, deg0, deg1, prop_step=PROP_STEP,
                               precomputed=pre, force_tiled=True,
                               tm=128, tk=128)
    out_tiled = jax.block_until_ready(out_tiled)

    # Plain-JAX f32 reference of the same forward pass.
    inv_std = 1.0 / jnp.sqrt(run_var + 1e-5)
    scale = gamma * inv_std
    shift = beta - run_mean * gamma * inv_std
    h_ref = jnp.maximum((x @ w1) * scale + shift, 0.0) @ w2
    ori = h_ref
    dinv0 = jnp.where(deg0 > 0, deg0 ** -0.5, 0.0)
    dinv1 = jnp.where(deg1 > 0, deg1 ** -0.5, 0.0)
    dsum = deg0 + deg1
    coef_ref = jnp.where(dsum > 0, 0.01 / dsum, 0.0)
    for _ in range(PROP_STEP):
        n0 = dinv0 * (a0 @ (dinv0 * h_ref))
        n1 = dinv1 * (a1 @ (dinv1 * h_ref))
        h_ref = h_ref - coef_ref * h_ref + coef_ref * ori + n0 - n1

    assert out_fused.shape == (N, HIDDEN)
    assert out_tiled.shape == (N, HIDDEN)
    # bf16 adjacency matmul => small relative error vs the f32 reference.
    assert jnp.allclose(out_fused, h_ref, atol=1e-2, rtol=1e-2), "fused vs f32 ref"
    assert jnp.allclose(out_tiled, h_ref, atol=1e-2, rtol=1e-2), "tiled vs f32 ref"
    # Both Pallas paths compute the same bf16 math (different accumulation
    # order only); they must agree tightly.
    assert jnp.allclose(out_fused, out_tiled, atol=5e-3, rtol=5e-3), "fused vs tiled"
    print("KERNEL_OK")
</pallas_src>

<mosaic_0001>
module attributes {stable_mosaic.version = 11 : i64} {
  func.func @_fused_kernel(%arg0: memref<32x256xf32, #tpu.memory_space<vmem>>, %arg1: memref<128x32xf32, #tpu.memory_space<vmem>>, %arg2: memref<128x1xf32, #tpu.memory_space<vmem>>, %arg3: memref<128x1xf32, #tpu.memory_space<vmem>>, %arg4: memref<128x128xf32, #tpu.memory_space<vmem>>, %arg5: memref<256x256xbf16, #tpu.memory_space<vmem>>, %arg6: memref<1x256xf32, #tpu.memory_space<vmem>>, %arg7: memref<128x256xf32, #tpu.memory_space<vmem>>) attributes {dimension_semantics = [], scalar_prefetch = 0 : i64, scratch_operands = 0 : i64, tpu.core_type = #tpu.core_type<tc>} {
    %c0 = arith.constant 0 : index
    %c0_0 = arith.constant 0 : index
    %0 = vector.load %arg1[%c0, %c0_0] : memref<128x32xf32, #tpu.memory_space<vmem>>, vector<128x32xf32>
    %c0_1 = arith.constant 0 : index
    %c0_2 = arith.constant 0 : index
    %1 = vector.load %arg0[%c0_1, %c0_2] : memref<32x256xf32, #tpu.memory_space<vmem>>, vector<32x256xf32>
    %cst = arith.constant dense<0.000000e+00> : vector<128x256xf32>
    %2 = tpu.matmul %0, %1, %cst {dimension_numbers = #tpu.dot_dimension_numbers<[1], [0], [0], [1], [0, 0, 1, 1], [], []>} : vector<128x32xf32>, vector<32x256xf32>, vector<128x256xf32> -> vector<128x256xf32>
    %c0_3 = arith.constant 0 : index
    %c0_4 = arith.constant 0 : index
    %3 = vector.load %arg2[%c0_3, %c0_4] : memref<128x1xf32, #tpu.memory_space<vmem>>, vector<128x1xf32>
    %4 = vector.broadcast %3 : vector<128x1xf32> to vector<128x256xf32>
    %5 = arith.mulf %2, %4 : vector<128x256xf32>
    %c0_5 = arith.constant 0 : index
    %c0_6 = arith.constant 0 : index
    %6 = vector.load %arg3[%c0_5, %c0_6] : memref<128x1xf32, #tpu.memory_space<vmem>>, vector<128x1xf32>
    %7 = vector.broadcast %6 : vector<128x1xf32> to vector<128x256xf32>
    %8 = arith.addf %5, %7 : vector<128x256xf32>
    %cst_7 = arith.constant 0.000000e+00 : f32
    %9 = vector.broadcast %cst_7 : f32 to vector<128x256xf32>
    %10 = arith.maximumf %8, %9 : vector<128x256xf32>
    %c0_8 = arith.constant 0 : index
    %c0_9 = arith.constant 0 : index
    %11 = vector.load %arg4[%c0_8, %c0_9] : memref<128x128xf32, #tpu.memory_space<vmem>>, vector<128x128xf32>
    %cst_10 = arith.constant dense<0.000000e+00> : vector<128x256xf32>
    %12 = tpu.matmul %11, %10, %cst_10 {dimension_numbers = #tpu.dot_dimension_numbers<[1], [0], [0], [1], [0, 0, 1, 1], [], []>} : vector<128x128xf32>, vector<128x256xf32>, vector<128x256xf32> -> vector<128x256xf32>
    %c0_11 = arith.constant 0 : index
    %c0_12 = arith.constant 0 : index
    %13 = vector.load %arg6[%c0_11, %c0_12] : memref<1x256xf32, #tpu.memory_space<vmem>>, vector<1x256xf32>
    %cst_13 = arith.constant 1.000000e+00 : f32
    %14 = vector.broadcast %cst_13 : f32 to vector<1x256xf32>
    %15 = arith.subf %14, %13 : vector<1x256xf32>
    %16 = vector.broadcast %13 : vector<1x256xf32> to vector<128x256xf32>
    %17 = arith.mulf %12, %16 : vector<128x256xf32>
    %c0_14 = arith.constant 0 : index
    %c0_15 = arith.constant 0 : index
    %18 = vector.load %arg5[%c0_14, %c0_15] : memref<256x256xbf16, #tpu.memory_space<vmem>>, vector<256x256xbf16>
    %19 = arith.truncf %12 : vector<128x256xf32> to vector<128x256xbf16>
    %cst_16 = arith.constant dense<0.000000e+00> : vector<128x256xf32>
    %20 = tpu.matmul %19, %18, %cst_16 {dimension_numbers = #tpu.dot_dimension_numbers<[1], [0], [0], [1], [0, 0, 1, 1], [], []>} : vector<128x256xbf16>, vector<256x256xbf16>, vector<128x256xf32> -> vector<128x256xf32>
    %21 = vector.broadcast %15 : vector<1x256xf32> to vector<128x256xf32>
    %22 = arith.mulf %12, %21 : vector<128x256xf32>
    %23 = arith.addf %22, %17 : vector<128x256xf32>
    %24 = arith.addf %23, %20 : vector<128x256xf32>
    %25 = arith.truncf %24 : vector<128x256xf32> to vector<128x256xbf16>
    %cst_17 = arith.constant dense<0.000000e+00> : vector<128x256xf32>
    %26 = tpu.matmul %25, %18, %cst_17 {dimension_numbers = #tpu.dot_dimension_numbers<[1], [0], [0], [1], [0, 0, 1, 1], [], []>} : vector<128x256xbf16>, vector<256x256xbf16>, vector<128x256xf32> -> vector<128x256xf32>
    %27 = vector.broadcast %15 : vector<1x256xf32> to vector<128x256xf32>
    %28 = arith.mulf %24, %27 : vector<128x256xf32>
    %29 = arith.addf %28, %17 : vector<128x256xf32>
    %30 = arith.addf %29, %26 : vector<128x256xf32>
    %c0_18 = arith.constant 0 : index
    %c0_19 = arith.constant 0 : index
    %31 = vector.load %arg7[%c0_18, %c0_19] : memref<128x256xf32, #tpu.memory_space<vmem>>, vector<128x256xf32>
    tpu.vector_store %arg7[%c0_18, %c0_19], %30 {strides = array<i32>} : memref<128x256xf32, #tpu.memory_space<vmem>>, vector<128x256xf32>,
    return
  }
}

</mosaic_0001>

<llo_original>
// kernel: tpu_custom_call.1
$region0: #{tpu_custom_call.1}
  #allocation0 [shape = 'u32[]', space=smem, size = 0x4, offset = 0x4, fixed_abs, tag = 'smem constant byte address 0x4 - core index']
  #allocation1 [shape = 'u32[144,128]{1,0:T(1,128)}', space=vmem, size = 0x12000, scoped, tag = 'internal scratch']
  %s0 = inlined_call_operand.hbm [shape: f32[32,256], index: 0, kind: input, shape index: {}]
  %s1 = inlined_call_operand.vmem [shape: f32[128,32], index: 1, kind: input, shape index: {}]
  %s2 = inlined_call_operand.vmem [shape: f32[128,1], index: 2, kind: input, shape index: {}]
  %s3 = inlined_call_operand.vmem [shape: f32[128,1], index: 3, kind: input, shape index: {}]
  %s4 = inlined_call_operand.vmem [shape: f32[128,128], index: 4, kind: input, shape index: {}]
  %s5 = inlined_call_operand.vmem [shape: bf16[256,256], index: 5, kind: input, shape index: {}]
  %s6 = inlined_call_operand.vmem [shape: f32[1,256], index: 6, kind: input, shape index: {}]
  %s7 = inlined_call_operand.hbm [shape: f32[128,256], index: 7, kind: output, shape index: {}]
  %s8 = sld [smem:[#allocation0]]
  $region42: #{tpu_custom_call.1} parent=0
    _
  %s10 = ssub.s32 1, %s8
  %s11 = scalar_select 0, %s10, %s8
  $region1: #{tpu_custom_call.1} parent=0
    #allocation2 [shape = 'u8[32768]{0}', space=vmem, size = 0x8000, scoped, tag = 'input window, operand 0, single buffered']
    #allocation3 [shape = 's32[1]{0}', space=sflag, size = 0x4, scoped, tag = 'scoped memory for tpu_custom_call.1']
    #allocation4 [shape = 's32[1]{0}', space=sflag, size = 0x4, scoped, tag = 'scoped memory for tpu_custom_call.1']
    #allocation5 [shape = 'u8[131072]{0}', space=vmem, size = 0x20000, scoped, tag = 'output window, operand 0, single buffered']
    %12 = vsyncpa [#allocation3], 0
    %13 = vsyncpa [#allocation4], 0
    // Predicated region
    $region2: #{tpu_custom_call.1} parent=1 // pred_check
      _
    $region3: #{tpu_custom_call.1} parent=1 // pred_check_branch
      %15 = sbr.rel (0) target = $region5
    $region4: #{tpu_custom_call.1} parent=1 // pred_region
      %s17 = ssub.s32 1024, 1024
      %18 = vsyncadd [#allocation3], %s17
      %s19 = sshll.u32 [#allocation2], 4
      %s20 = int_to_ptr.vmem [resolvable:$true] %s19
      %25 = dma.hbm_to_vmem [thread:$0]  %s0, 1024, %s20, [#allocation3], 256, 256, 16
    $region5: #{tpu_custom_call.1} parent=1 // pred_fallthru
      _
    // Predicated region
    $region6: #{tpu_custom_call.1} parent=1 // pred_check
      _
    $region7: #{tpu_custom_call.1} parent=1 // pred_check_branch
      %27 = sbr.rel (0) target = $region9
    $region8: #{tpu_custom_call.1} parent=1 // pred_region
      _
    $region9: #{tpu_custom_call.1} parent=1 // pred_fallthru
      _
    // Predicated region
    $region10: #{tpu_custom_call.1} parent=1 // pred_check
      _
    $region11: #{tpu_custom_call.1} parent=1 // pred_check_branch
      %29 = sbr.rel (0) target = $region13
    $region12: #{tpu_custom_call.1} parent=1 // pred_region
      _
    $region13: #{tpu_custom_call.1} parent=1 // pred_fallthru
      _
    // Predicated region
    $region14: #{tpu_custom_call.1} parent=1 // pred_check
      _
    $region15: #{tpu_custom_call.1} parent=1 // pred_check_branch
      %31 = sbr.rel (0) target = $region17
    $region16: #{tpu_custom_call.1} parent=1 // pred_region
      _
    $region17: #{tpu_custom_call.1} parent=1 // pred_fallthru
      _
    // Predicated region
    $region18: #{tpu_custom_call.1} parent=1 // pred_check
      _
    $region19: #{tpu_custom_call.1} parent=1 // pred_check_branch
      %33 = sbr.rel (0) target = $region21
    $region20: #{tpu_custom_call.1} parent=1 // pred_region
      _
    $region21: #{tpu_custom_call.1} parent=1 // pred_fallthru
      _
    // Predicated region
    $region22: #{tpu_custom_call.1} parent=1 // pred_check
      _
    $region23: #{tpu_custom_call.1} parent=1 // pred_check_branch
      %35 = sbr.rel (0) target = $region25
    $region24: #{tpu_custom_call.1} parent=1 // pred_region
      _
    $region25: #{tpu_custom_call.1} parent=1 // pred_fallthru
      _
    // Predicated region
    $region26: #{tpu_custom_call.1} parent=1 // pred_check
      _
    $region27: #{tpu_custom_call.1} parent=1 // pred_check_branch
      %37 = sbr.rel (0) target = $region29
    $region28: #{tpu_custom_call.1} parent=1 // pred_region
      _
    $region29: #{tpu_custom_call.1} parent=1 // pred_fallthru
      _
    // Predicated region
    $region30: #{tpu_custom_call.1} parent=1 // pred_check
      _
    $region31: #{tpu_custom_call.1} parent=1 // pred_check_branch
      %39 = sbr.rel (0) target = $region33
    $region32: #{tpu_custom_call.1} parent=1 // pred_region
      %40 = dma.done [#allocation3], 1024
    $region33: #{tpu_custom_call.1} parent=1 // pred_fallthru
      _
    %v41 = vld [vmem:[%s1] sm:$0xff]
    %v42 = vld [vmem:[%s1 + $0x8] sm:$0xff]
    %v43 = vld [vmem:[%s1 + $0x10] sm:$0xff]
    %v44 = vld [vmem:[%s1 + $0x18] sm:$0xff]
    %v45 = vld [vmem:[%s1 + $0x20] sm:$0xff]
    %v46 = vld [vmem:[%s1 + $0x28] sm:$0xff]
    %v47 = vld [vmem:[%s1 + $0x30] sm:$0xff]
    %v48 = vld [vmem:[%s1 + $0x38] sm:$0xff]
    %v49 = vld [vmem:[%s1 + $0x40] sm:$0xff]
    %v50 = vld [vmem:[%s1 + $0x48] sm:$0xff]
    %v51 = vld [vmem:[%s1 + $0x50] sm:$0xff]
    %v52 = vld [vmem:[%s1 + $0x58] sm:$0xff]
    %v53 = vld [vmem:[%s1 + $0x60] sm:$0xff]
    %v54 = vld [vmem:[%s1 + $0x68] sm:$0xff]
    %v55 = vld [vmem:[%s1 + $0x70] sm:$0xff]
    %v56 = vld [vmem:[%s1 + $0x78] sm:$0xff]
    %v57 = vld [vmem:[#allocation2] sm:$0xff]
    %v58 = vld [vmem:[#allocation2 + $0x8] sm:$0xff]
    %v59 = vld [vmem:[#allocation2 + $0x10] sm:$0xff]
    %v60 = vld [vmem:[#allocation2 + $0x18] sm:$0xff]
    %v61 = vld [vmem:[#allocation2 + $0x20] sm:$0xff]
    %v62 = vld [vmem:[#allocation2 + $0x28] sm:$0xff]
    %v63 = vld [vmem:[#allocation2 + $0x30] sm:$0xff]
    %v64 = vld [vmem:[#allocation2 + $0x38] sm:$0xff]
    %vm65 = vcmask 261120
    %v67 = vsel %vm65, %v41, 0
    %v70 = vsel %vm65, %v42, 0
    %v73 = vsel %vm65, %v43, 0
    %v76 = vsel %vm65, %v44, 0
    %v79 = vsel %vm65, %v45, 0
    %v82 = vsel %vm65, %v46, 0
    %v85 = vsel %vm65, %v47, 0
    %v88 = vsel %vm65, %v48, 0
    %v91 = vsel %vm65, %v49, 0
    %v94 = vsel %vm65, %v50, 0
    %v97 = vsel %vm65, %v51, 0
    %v100 = vsel %vm65, %v52, 0
    %v103 = vsel %vm65, %v53, 0
    %v106 = vsel %vm65, %v54, 0
    %v109 = vsel %vm65, %v55, 0
    %v112 = vsel %vm65, %v56, 0
    %114 = vmatprep.subr.mxu0 %v58
    %115 = vmatpush1.msra.mxu0 %v57
    %116 = vmatprep.subr.mxu0 %v60
    %117 = vmatpush1.msra.mxu0 %v59
    %118 = vmatprep.subr.mxu0 %v62
    %119 = vmatpush1.msra.mxu0 %v61
    %120 = vmatprep.subr.mxu0 %v64
    %121 = vmatpush1.msra.mxu0 %v63
    %122 = vmatprep.subr.mxu0 0.0
    %123 = vmatpush1.msra.mxu0 0.0
    %124 = vmatprep.subr.mxu0 0.0
    %125 = vmatpush1.msra.mxu0 0.0
    %126 = vmatprep.subr.mxu0 0.0
    %127 = vmatpush1.msra.mxu0 0.0
    %128 = vmatprep.subr.mxu0 0.0
    %129 = vmatpush1.msra.mxu0 0.0
    %130 = vmatprep.subr.mxu0 0.0
    %131 = vmatpush1.msra.mxu0 0.0
    %132 = vmatprep.subr.mxu0 0.0
    %133 = vmatpush1.msra.mxu0 0.0
    %134 = vmatprep.subr.mxu0 0.0
    %135 = vmatpush1.msra.mxu0 0.0
    %136 = vmatprep.subr.mxu0 0.0
    %137 = vmatpush1.msra.mxu0 0.0
    %138 = vmatprep.subr.mxu0 0.0
    %139 = vmatpush1.msra.mxu0 0.0
    %140 = vmatprep.subr.mxu0 0.0
    %141 = vmatpush1.msra.mxu0 0.0
    %142 = vmatprep.subr.mxu0 0.0
    %143 = vmatpush1.msra.mxu0 0.0
    %144 = vmatprep.subr.mxu0 0.0
    %145 = vmatpush1.msra.mxu0 0.0
    %146 = vmatprep.subr.mxu0 0.0
    %147 = vmatpush1.msra.mxu0 0.0
    %148 = vmatprep.subr.mxu0 0.0
    %149 = vmatpush1.msra.mxu0 0.0
    %150 = vmatprep.subr.mxu0 0.0
    %151 = vmatpush1.msra.mxu0 0.0
    %152 = vmatprep.subr.mxu0 0.0
    %153 = vmatpush1.msra.mxu0 0.0
    %154 = vmatprep.subr.mxu0 0.0
    %155 = vmatpush1.msra.mxu0 0.0
    %156 = vmatprep.subr.mxu0 0.0
    %157 = vmatpush1.msra.mxu0 0.0
    %158 = vmatprep.subr.mxu0 0.0
    %159 = vmatpush1.msra.mxu0 0.0
    %160 = vmatprep.subr.mxu0 0.0
    %161 = vmatpush1.msra.mxu0 0.0
    %162 = vmatprep.subr.mxu0 0.0
    %163 = vmatpush1.msra.mxu0 0.0
    %164 = vmatprep.subr.mxu0 0.0
    %165 = vmatpush1.msra.mxu0 0.0
    %166 = vmatprep.subr.mxu0 0.0
    %167 = vmatpush1.msra.mxu0 0.0
    %168 = vmatprep.subr.mxu0 0.0
    %169 = vmatpush1.msra.mxu0 0.0
    %170 = vmatprep.subr.mxu0 0.0
    %171 = vmatpush1.msra.mxu0 0.0
    %172 = vmatprep.subr.mxu0 0.0
    %173 = vmatpush1.msra.mxu0 0.0
    %174 = vmatprep.subr.mxu0 0.0
    %175 = vmatpush1.msra.mxu0 0.0
    %176 = vmatprep.subr.mxu0 0.0
    %177 = vmatpush1.msra.mxu0 0.0
    %178 = vmatprep.mubr.f32.mxu0 0.0
    %179 = vmatmul.mubr.f32.gmra.mrb[0].mxu0 %v67
    %v180 = vpop.f32.mrb[0].mxu0
    %v181 = vadd.f32 0.0, %v180
    %v182 = vpop.f32.mrb[0].mxu0
    %v183 = vadd.f32 0.0, %v182
    %184 = vmatprep.mubr.f32.mxu0 0.0
    %185 = vmatmul.mubr.f32.gmra.mrb[0].mxu0 %v70
    %v186 = vpop.f32.mrb[0].mxu0
    %v187 = vadd.f32 0.0, %v186
    %v188 = vpop.f32.mrb[0].mxu0
    %v189 = vadd.f32 0.0, %v188
    %190 = vmatprep.mubr.f32.mxu0 0.0
    %191 = vmatmul.mubr.f32.gmra.mrb[0].mxu0 %v73
    %v192 = vpop.f32.mrb[0].mxu0
    %v193 = vadd.f32 0.0, %v192
    %v194 = vpop.f32.mrb[0].mxu0
    %v195 = vadd.f32 0.0, %v194
    %196 = vmatprep.mubr.f32.mxu0 0.0
    %197 = vmatmul.mubr.f32.gmra.mrb[0].mxu0 %v76
    %v198 = vpop.f32.mrb[0].mxu0
    %v199 = vadd.f32 0.0, %v198
    %v200 = vpop.f32.mrb[0].mxu0
    %v201 = vadd.f32 0.0, %v200
    %202 = vmatprep.mubr.f32.mxu0 0.0
    %203 = vmatmul.mubr.f32.gmra.mrb[0].mxu0 %v79
    %v204 = vpop.f32.mrb[0].mxu0
    %v205 = vadd.f32 0.0, %v204
    %v206 = vpop.f32.mrb[0].mxu0
    %v207 = vadd.f32 0.0, %v206
    %208 = vmatprep.mubr.f32.mxu0 0.0
    %209 = vmatmul.mubr.f32.gmra.mrb[0].mxu0 %v82
    %v210 = vpop.f32.mrb[0].mxu0
    %v211 = vadd.f32 0.0, %v210
    %v212 = vpop.f32.mrb[0].mxu0
    %v213 = vadd.f32 0.0, %v212
    %214 = vmatprep.mubr.f32.mxu0 0.0
    %215 = vmatmul.mubr.f32.gmra.mrb[0].mxu0 %v85
    %v216 = vpop.f32.mrb[0].mxu0
    %v217 = vadd.f32 0.0, %v216
    %v218 = vpop.f32.mrb[0].mxu0
    %v219 = vadd.f32 0.0, %v218
    %220 = vmatprep.mubr.f32.mxu0 0.0
    %221 = vmatmul.mubr.f32.gmra.mrb[0].mxu0 %v88
    %v222 = vpop.f32.mrb[0].mxu0
    %v223 = vadd.f32 0.0, %v222
    %v224 = vpop.f32.mrb[0].mxu0
    %v225 = vadd.f32 0.0, %v224
    %226 = vmatprep.mubr.f32.mxu0 0.0
    %227 = vmatmul.mubr.f32.gmra.mrb[0].mxu0 %v91
    %v228 = vpop.f32.mrb[0].mxu0
    %v229 = vadd.f32 0.0, %v228
    %v230 = vpop.f32.mrb[0].mxu0
    %v231 = vadd.f32 0.0, %v230
    %232 = vmatprep.mubr.f32.mxu0 0.0
    %233 = vmatmul.mubr.f32.gmra.mrb[0].mxu0 %v94
    %v234 = vpop.f32.mrb[0].mxu0
    %v235 = vadd.f32 0.0, %v234
    %v236 = vpop.f32.mrb[0].mxu0
    %v237 = vadd.f32 0.0, %v236
    %238 = vmatprep.mubr.f32.mxu0 0.0
    %239 = vmatmul.mubr.f32.gmra.mrb[0].mxu0 %v97
    %v240 = vpop.f32.mrb[0].mxu0
    %v241 = vadd.f32 0.0, %v240
    %v242 = vpop.f32.mrb[0].mxu0
    %v243 = vadd.f32 0.0, %v242
    %244 = vmatprep.mubr.f32.mxu0 0.0
    %245 = vmatmul.mubr.f32.gmra.mrb[0].mxu0 %v100
    %v246 = vpop.f32.mrb[0].mxu0
    %v247 = vadd.f32 0.0, %v246
    %v248 = vpop.f32.mrb[0].mxu0
    %v249 = vadd.f32 0.0, %v248
    %250 = vmatprep.mubr.f32.mxu0 0.0
    %251 = vmatmul.mubr.f32.gmra.mrb[0].mxu0 %v103
    %v252 = vpop.f32.mrb[0].mxu0
    %v253 = vadd.f32 0.0, %v252
    %v254 = vpop.f32.mrb[0].mxu0
    %v255 = vadd.f32 0.0, %v254
    %256 = vmatprep.mubr.f32.mxu0 0.0
    %257 = vmatmul.mubr.f32.gmra.mrb[0].mxu0 %v106
    %v258 = vpop.f32.mrb[0].mxu0
    %v259 = vadd.f32 0.0, %v258
    %v260 = vpop.f32.mrb[0].mxu0
    %v261 = vadd.f32 0.0, %v260
    %262 = vmatprep.mubr.f32.mxu0 0.0
    %263 = vmatmul.mubr.f32.gmra.mrb[0].mxu0 %v109
    %v264 = vpop.f32.mrb[0].mxu0
    %v265 = vadd.f32 0.0, %v264
    %v266 = vpop.f32.mrb[0].mxu0
    %v267 = vadd.f32 0.0, %v266
    %268 = vmatprep.mubr.f32.mxu0 0.0
    %269 = vmatmul.mubr.f32.gmra.mrb[0].mxu0 %v112
    %v270 = vpop.f32.mrb[0].mxu0
    %v271 = vadd.f32 0.0, %v270
    %v272 = vpop.f32.mrb[0].mxu0
    %v273 = vadd.f32 0.0, %v272
    %274 = vdwg.mxu0
    %v275 = vld [vmem:[%s2] sm:$0xff]
    %v276 = vld [vmem:[%s2 + $0x8] sm:$0xff]
    %v277 = vld [vmem:[%s2 + $0x10] sm:$0xff]
    %v278 = vld [vmem:[%s2 + $0x18] sm:$0xff]
    %v279 = vld [vmem:[%s2 + $0x20] sm:$0xff]
    %v280 = vld [vmem:[%s2 + $0x28] sm:$0xff]
    %v281 = vld [vmem:[%s2 + $0x30] sm:$0xff]
    %v282 = vld [vmem:[%s2 + $0x38] sm:$0xff]
    %v283 = vld [vmem:[%s2 + $0x40] sm:$0xff]
    %v284 = vld [vmem:[%s2 + $0x48] sm:$0xff]
    %v285 = vld [vmem:[%s2 + $0x50] sm:$0xff]
    %v286 = vld [vmem:[%s2 + $0x58] sm:$0xff]
    %v287 = vld [vmem:[%s2 + $0x60] sm:$0xff]
    %v288 = vld [vmem:[%s2 + $0x68] sm:$0xff]
    %v289 = vld [vmem:[%s2 + $0x70] sm:$0xff]
    %v290 = vld [vmem:[%s2 + $0x78] sm:$0xff]
    %292 = vset.pattern.permute.xlu0 0
    %293 = vperm.xlu0 %292, %v275
    %v294 = vpop.permute.xlu0 %293
    %297 = vset.pattern.permute.xlu0 0
    %298 = vperm.xlu0 %297, %v276
    %v299 = vpop.permute.xlu0 %298
    %302 = vset.pattern.permute.xlu0 0
    %303 = vperm.xlu0 %302, %v277
    %v304 = vpop.permute.xlu0 %303
    %307 = vset.pattern.permute.xlu0 0
    %308 = vperm.xlu0 %307, %v278
    %v309 = vpop.permute.xlu0 %308
    %312 = vset.pattern.permute.xlu0 0
    %313 = vperm.xlu0 %312, %v279
    %v314 = vpop.permute.xlu0 %313
    %317 = vset.pattern.permute.xlu0 0
    %318 = vperm.xlu0 %317, %v280
    %v319 = vpop.permute.xlu0 %318
    %322 = vset.pattern.permute.xlu0 0
    %323 = vperm.xlu0 %322, %v281
    %v324 = vpop.permute.xlu0 %323
    %327 = vset.pattern.permute.xlu0 0
    %328 = vperm.xlu0 %327, %v282
    %v329 = vpop.permute.xlu0 %328
    %332 = vset.pattern.permute.xlu0 0
    %333 = vperm.xlu0 %332, %v283
    %v334 = vpop.permute.xlu0 %333
    %337 = vset.pattern.permute.xlu0 0
    %338 = vperm.xlu0 %337, %v284
    %v339 = vpop.permute.xlu0 %338
    %342 = vset.pattern.permute.xlu0 0
    %343 = vperm.xlu0 %342, %v285
    %v344 = vpop.permute.xlu0 %343
    %347 = vset.pattern.permute.xlu0 0
    %348 = vperm.xlu0 %347, %v286
    %v349 = vpop.permute.xlu0 %348
    %352 = vset.pattern.permute.xlu0 0
    %353 = vperm.xlu0 %352, %v287
    %v354 = vpop.permute.xlu0 %353
    %357 = vset.pattern.permute.xlu0 0
    %358 = vperm.xlu0 %357, %v288
    %v359 = vpop.permute.xlu0 %358
    %362 = vset.pattern.permute.xlu0 0
    %363 = vperm.xlu0 %362, %v289
    %v364 = vpop.permute.xlu0 %363
    %367 = vset.pattern.permute.xlu0 0
    %368 = vperm.xlu0 %367, %v290
    %v369 = vpop.permute.xlu0 %368
    %v371 = vmul.f32 %v181, %v294
    %v372 = vmul.f32 %v183, %v294
    %v373 = vmul.f32 %v187, %v299
    %v374 = vmul.f32 %v189, %v299
    %v375 = vmul.f32 %v193, %v304
    %v376 = vmul.f32 %v195, %v304
    %v377 = vmul.f32 %v199, %v309
    %v378 = vmul.f32 %v201, %v309
    %v379 = vmul.f32 %v205, %v314
    %v380 = vmul.f32 %v207, %v314
    %v381 = vmul.f32 %v211, %v319
    %v382 = vmul.f32 %v213, %v319
    %v383 = vmul.f32 %v217, %v324
    %v384 = vmul.f32 %v219, %v324
    %v385 = vmul.f32 %v223, %v329
    %v386 = vmul.f32 %v225, %v329
    %v387 = vmul.f32 %v229, %v334
    %v388 = vmul.f32 %v231, %v334
    %v389 = vmul.f32 %v235, %v339
    %v390 = vmul.f32 %v237, %v339
    %v391 = vmul.f32 %v241, %v344
    %v392 = vmul.f32 %v243, %v344
    %v393 = vmul.f32 %v247, %v349
    %v394 = vmul.f32 %v249, %v349
    %v395 = vmul.f32 %v253, %v354
    %v396 = vmul.f32 %v255, %v354
    %v397 = vmul.f32 %v259, %v359
    %v398 = vmul.f32 %v261, %v359
    %v399 = vmul.f32 %v265, %v364
    %v400 = vmul.f32 %v267, %v364
    %v401 = vmul.f32 %v271, %v369
    %v402 = vmul.f32 %v273, %v369
    %v403 = vld [vmem:[%s3] sm:$0xff]
    %v404 = vld [vmem:[%s3 + $0x8] sm:$0xff]
    %v405 = vld [vmem:[%s3 + $0x10] sm:$0xff]
    %v406 = vld [vmem:[%s3 + $0x18] sm:$0xff]
    %v407 = vld [vmem:[%s3 + $0x20] sm:$0xff]
    %v408 = vld [vmem:[%s3 + $0x28] sm:$0xff]
    %v409 = vld [vmem:[%s3 + $0x30] sm:$0xff]
    %v410 = vld [vmem:[%s3 + $0x38] sm:$0xff]
    %v411 = vld [vmem:[%s3 + $0x40] sm:$0xff]
    %v412 = vld [vmem:[%s3 + $0x48] sm:$0xff]
    %v413 = vld [vmem:[%s3 + $0x50] sm:$0xff]
    %v414 = vld [vmem:[%s3 + $0x58] sm:$0xff]
    %v415 = vld [vmem:[%s3 + $0x60] sm:$0xff]
    %v416 = vld [vmem:[%s3 + $0x68] sm:$0xff]
    %v417 = vld [vmem:[%s3 + $0x70] sm:$0xff]
    %v418 = vld [vmem:[%s3 + $0x78] sm:$0xff]
    %420 = vset.pattern.permute.xlu0 0
    %421 = vperm.xlu0 %420, %v403
    %v422 = vpop.permute.xlu0 %421
    %425 = vset.pattern.permute.xlu0 0
    %426 = vperm.xlu0 %425, %v404
    %v427 = vpop.permute.xlu0 %426
    %430 = vset.pattern.permute.xlu0 0
    %431 = vperm.xlu0 %430, %v405
    %v432 = vpop.permute.xlu0 %431
    %435 = vset.pattern.permute.xlu0 0
    %436 = vperm.xlu0 %435, %v406
    %v437 = vpop.permute.xlu0 %436
    %440 = vset.pattern.permute.xlu0 0
    %441 = vperm.xlu0 %440, %v407
    %v442 = vpop.permute.xlu0 %441
    %445 = vset.pattern.permute.xlu0 0
    %446 = vperm.xlu0 %445, %v408
    %v447 = vpop.permute.xlu0 %446
    %450 = vset.pattern.permute.xlu0 0
    %451 = vperm.xlu0 %450, %v409
    %v452 = vpop.permute.xlu0 %451
    %455 = vset.pattern.permute.xlu0 0
    %456 = vperm.xlu0 %455, %v410
    %v457 = vpop.permute.xlu0 %456
    %460 = vset.pattern.permute.xlu0 0
    %461 = vperm.xlu0 %460, %v411
    %v462 = vpop.permute.xlu0 %461
    %465 = vset.pattern.permute.xlu0 0
    %466 = vperm.xlu0 %465, %v412
    %v467 = vpop.permute.xlu0 %466
    %470 = vset.pattern.permute.xlu0 0
    %471 = vperm.xlu0 %470, %v413
    %v472 = vpop.permute.xlu0 %471
    %475 = vset.pattern.permute.xlu0 0
    %476 = vperm.xlu0 %475, %v414
    %v477 = vpop.permute.xlu0 %476
    %480 = vset.pattern.permute.xlu0 0
    %481 = vperm.xlu0 %480, %v415
    %v482 = vpop.permute.xlu0 %481
    %485 = vset.pattern.permute.xlu0 0
    %486 = vperm.xlu0 %485, %v416
    %v487 = vpop.permute.xlu0 %486
    %490 = vset.pattern.permute.xlu0 0
    %491 = vperm.xlu0 %490, %v417
    %v492 = vpop.permute.xlu0 %491
    %495 = vset.pattern.permute.xlu0 0
    %496 = vperm.xlu0 %495, %v418
    %v497 = vpop.permute.xlu0 %496
    %v499 = vadd.f32 %v371, %v422
    %v500 = vadd.f32 %v372, %v422
    %v501 = vadd.f32 %v373, %v427
    %v502 = vadd.f32 %v374, %v427
    %v503 = vadd.f32 %v375, %v432
    %v504 = vadd.f32 %v376, %v432
    %v505 = vadd.f32 %v377, %v437
    %v506 = vadd.f32 %v378, %v437
    %v507 = vadd.f32 %v379, %v442
    %v508 = vadd.f32 %v380, %v442
    %v509 = vadd.f32 %v381, %v447
    %v510 = vadd.f32 %v382, %v447
    %v511 = vadd.f32 %v383, %v452
    %v512 = vadd.f32 %v384, %v452
    %v513 = vadd.f32 %v385, %v457
    %v514 = vadd.f32 %v386, %v457
    %v515 = vadd.f32 %v387, %v462
    %v516 = vadd.f32 %v388, %v462
    %v517 = vadd.f32 %v389, %v467
    %v518 = vadd.f32 %v390, %v467
    %v519 = vadd.f32 %v391, %v472
    %v520 = vadd.f32 %v392, %v472
    %v521 = vadd.f32 %v393, %v477
    %v522 = vadd.f32 %v394, %v477
    %v523 = vadd.f32 %v395, %v482
    %v524 = vadd.f32 %v396, %v482
    %v525 = vadd.f32 %v397, %v487
    %v526 = vadd.f32 %v398, %v487
    %v527 = vadd.f32 %v399, %v492
    %v528 = vadd.f32 %v400, %v492
    %v529 = vadd.f32 %v401, %v497
    %v530 = vadd.f32 %v402, %v497
    %v531 = vmax.f32 %v499, 0.0
    %v532 = vmax.f32 %v500, 0.0
    %v533 = vmax.f32 %v501, 0.0
    %v534 = vmax.f32 %v502, 0.0
    %v535 = vmax.f32 %v503, 0.0
    %v536 = vmax.f32 %v504, 0.0
    %v537 = vmax.f32 %v505, 0.0
    %v538 = vmax.f32 %v506, 0.0
    %v539 = vmax.f32 %v507, 0.0
    %v540 = vmax.f32 %v508, 0.0
    %v541 = vmax.f32 %v509, 0.0
    %v542 = vmax.f32 %v510, 0.0
    %v543 = vmax.f32 %v511, 0.0
    %v544 = vmax.f32 %v512, 0.0
    %v545 = vmax.f32 %v513, 0.0
    %v546 = vmax.f32 %v514, 0.0
    %v547 = vmax.f32 %v515, 0.0
    %v548 = vmax.f32 %v516, 0.0
    %v549 = vmax.f32 %v517, 0.0
    %v550 = vmax.f32 %v518, 0.0
    %v551 = vmax.f32 %v519, 0.0
    %v552 = vmax.f32 %v520, 0.0
    %v553 = vmax.f32 %v521, 0.0
    %v554 = vmax.f32 %v522, 0.0
    %v555 = vmax.f32 %v523, 0.0
    %v556 = vmax.f32 %v524, 0.0
    %v557 = vmax.f32 %v525, 0.0
    %v558 = vmax.f32 %v526, 0.0
    %v559 = vmax.f32 %v527, 0.0
    %v560 = vmax.f32 %v528, 0.0
    %v561 = vmax.f32 %v529, 0.0
    %v562 = vmax.f32 %v530, 0.0
    %v563 = vld [vmem:[%s4] sm:$0xff]
    %v564 = vld [vmem:[%s4 + $0x8] sm:$0xff]
    %v565 = vld [vmem:[%s4 + $0x10] sm:$0xff]
    %v566 = vld [vmem:[%s4 + $0x18] sm:$0xff]
    %v567 = vld [vmem:[%s4 + $0x20] sm:$0xff]
    %v568 = vld [vmem:[%s4 + $0x28] sm:$0xff]
    %v569 = vld [vmem:[%s4 + $0x30] sm:$0xff]
    %v570 = vld [vmem:[%s4 + $0x38] sm:$0xff]
    %v571 = vld [vmem:[%s4 + $0x40] sm:$0xff]
    %v572 = vld [vmem:[%s4 + $0x48] sm:$0xff]
    %v573 = vld [vmem:[%s4 + $0x50] sm:$0xff]
    %v574 = vld [vmem:[%s4 + $0x58] sm:$0xff]
    %v575 = vld [vmem:[%s4 + $0x60] sm:$0xff]
    %v576 = vld [vmem:[%s4 + $0x68] sm:$0xff]
    %v577 = vld [vmem:[%s4 + $0x70] sm:$0xff]
    %v578 = vld [vmem:[%s4 + $0x78] sm:$0xff]
    %579 = vmatprep.subr.mxu0 %v532
    %580 = vmatpush1.msra.mxu0 %v531
    %581 = vmatprep.subr.mxu0 %v534
    %582 = vmatpush1.msra.mxu0 %v533
    %583 = vmatprep.subr.mxu0 %v536
    %584 = vmatpush1.msra.mxu0 %v535
    %585 = vmatprep.subr.mxu0 %v538
    %586 = vmatpush1.msra.mxu0 %v537
    %587 = vmatprep.subr.mxu0 %v540
    %588 = vmatpush1.msra.mxu0 %v539
    %589 = vmatprep.subr.mxu0 %v542
    %590 = vmatpush1.msra.mxu0 %v541
    %591 = vmatprep.subr.mxu0 %v544
    %592 = vmatpush1.msra.mxu0 %v543
    %593 = vmatprep.subr.mxu0 %v546
    %594 = vmatpush1.msra.mxu0 %v545
    %595 = vmatprep.subr.mxu0 %v548
    %596 = vmatpush1.msra.mxu0 %v547
    %597 = vmatprep.subr.mxu0 %v550
    %598 = vmatpush1.msra.mxu0 %v549
    %599 = vmatprep.subr.mxu0 %v552
    %600 = vmatpush1.msra.mxu0 %v551
    %601 = vmatprep.subr.mxu0 %v554
    %602 = vmatpush1.msra.mxu0 %v553
    %603 = vmatprep.subr.mxu0 %v556
    %604 = vmatpush1.msra.mxu0 %v555
    %605 = vmatprep.subr.mxu0 %v558
    %606 = vmatpush1.msra.mxu0 %v557
    %607 = vmatprep.subr.mxu0 %v560
    %608 = vmatpush1.msra.mxu0 %v559
    %609 = vmatprep.subr.mxu0 %v562
    %610 = vmatpush1.msra.mxu0 %v561
    %611 = vmatprep.subr.mxu0 0.0
    %612 = vmatpush1.msra.mxu0 0.0
    %613 = vmatprep.subr.mxu0 0.0
    %614 = vmatpush1.msra.mxu0 0.0
    %615 = vmatprep.subr.mxu0 0.0
    %616 = vmatpush1.msra.mxu0 0.0
    %617 = vmatprep.subr.mxu0 0.0
    %618 = vmatpush1.msra.mxu0 0.0
    %619 = vmatprep.subr.mxu0 0.0
    %620 = vmatpush1.msra.mxu0 0.0
    %621 = vmatprep.subr.mxu0 0.0
    %622 = vmatpush1.msra.mxu0 0.0
    %623 = vmatprep.subr.mxu0 0.0
    %624 = vmatpush1.msra.mxu0 0.0
    %625 = vmatprep.subr.mxu0 0.0
    %626 = vmatpush1.msra.mxu0 0.0
    %627 = vmatprep.subr.mxu0 0.0
    %628 = vmatpush1.msra.mxu0 0.0
    %629 = vmatprep.subr.mxu0 0.0
    %630 = vmatpush1.msra.mxu0 0.0
    %631 = vmatprep.subr.mxu0 0.0
    %632 = vmatpush1.msra.mxu0 0.0
    %633 = vmatprep.subr.mxu0 0.0
    %634 = vmatpush1.msra.mxu0 0.0
    %635 = vmatprep.subr.mxu0 0.0
    %636 = vmatpush1.msra.mxu0 0.0
    %637 = vmatprep.subr.mxu0 0.0
    %638 = vmatpush1.msra.mxu0 0.0
    %639 = vmatprep.subr.mxu0 0.0
    %640 = vmatpush1.msra.mxu0 0.0
    %641 = vmatprep.subr.mxu0 0.0
    %642 = vmatpush1.msra.mxu0 0.0
    %643 = vmatprep.mubr.f32.mxu0 0.0
    %644 = vmatmul.mubr.f32.gmra.mrb[0].mxu0 %v563
    %v645 = vpop.f32.mrb[0].mxu0
    %v646 = vadd.f32 0.0, %v645
    %v647 = vpop.f32.mrb[0].mxu0
    %v648 = vadd.f32 0.0, %v647
    %649 = vmatprep.mubr.f32.mxu0 0.0
    %650 = vmatmul.mubr.f32.gmra.mrb[0].mxu0 %v564
    %v651 = vpop.f32.mrb[0].mxu0
    %v652 = vadd.f32 0.0, %v651
    %v653 = vpop.f32.mrb[0].mxu0
    %v654 = vadd.f32 0.0, %v653
    %655 = vmatprep.mubr.f32.mxu0 0.0
    %656 = vmatmul.mubr.f32.gmra.mrb[0].mxu0 %v565
    %v657 = vpop.f32.mrb[0].mxu0
    %v658 = vadd.f32 0.0, %v657
    %v659 = vpop.f32.mrb[0].mxu0
    %v660 = vadd.f32 0.0, %v659
    %661 = vmatprep.mubr.f32.mxu0 0.0
    %662 = vmatmul.mubr.f32.gmra.mrb[0].mxu0 %v566
    %v663 = vpop.f32.mrb[0].mxu0
    %v664 = vadd.f32 0.0, %v663
    %v665 = vpop.f32.mrb[0].mxu0
    %v666 = vadd.f32 0.0, %v665
    %667 = vmatprep.mubr.f32.mxu0 0.0
    %668 = vmatmul.mubr.f32.gmra.mrb[0].mxu0 %v567
    %v669 = vpop.f32.mrb[0].mxu0
    %v670 = vadd.f32 0.0, %v669
    %v671 = vpop.f32.mrb[0].mxu0
    %v672 = vadd.f32 0.0, %v671
    %673 = vmatprep.mubr.f32.mxu0 0.0
    %674 = vmatmul.mubr.f32.gmra.mrb[0].mxu0 %v568
    %v675 = vpop.f32.mrb[0].mxu0
    %v676 = vadd.f32 0.0, %v675
    %v677 = vpop.f32.mrb[0].mxu0
    %v678 = vadd.f32 0.0, %v677
    %679 = vmatprep.mubr.f32.mxu0 0.0
    %680 = vmatmul.mubr.f32.gmra.mrb[0].mxu0 %v569
    %v681 = vpop.f32.mrb[0].mxu0
    %v682 = vadd.f32 0.0, %v681
    %v683 = vpop.f32.mrb[0].mxu0
    %v684 = vadd.f32 0.0, %v683
    %685 = vmatprep.mubr.f32.mxu0 0.0
    %686 = vmatmul.mubr.f32.gmra.mrb[0].mxu0 %v570
    %v687 = vpop.f32.mrb[0].mxu0
    %v688 = vadd.f32 0.0, %v687
    %v689 = vpop.f32.mrb[0].mxu0
    %v690 = vadd.f32 0.0, %v689
    %691 = vmatprep.mubr.f32.mxu0 0.0
    %692 = vmatmul.mubr.f32.gmra.mrb[0].mxu0 %v571
    %v693 = vpop.f32.mrb[0].mxu0
    %v694 = vadd.f32 0.0, %v693
    %v695 = vpop.f32.mrb[0].mxu0
    %v696 = vadd.f32 0.0, %v695
    %697 = vmatprep.mubr.f32.mxu0 0.0
    %698 = vmatmul.mubr.f32.gmra.mrb[0].mxu0 %v572
    %v699 = vpop.f32.mrb[0].mxu0
    %v700 = vadd.f32 0.0, %v699
    %v701 = vpop.f32.mrb[0].mxu0
    %v702 = vadd.f32 0.0, %v701
    %703 = vmatprep.mubr.f32.mxu0 0.0
    %704 = vmatmul.mubr.f32.gmra.mrb[0].mxu0 %v573
    %v705 = vpop.f32.mrb[0].mxu0
    %v706 = vadd.f32 0.0, %v705
    %v707 = vpop.f32.mrb[0].mxu0
    %v708 = vadd.f32 0.0, %v707
    %709 = vmatprep.mubr.f32.mxu0 0.0
    %710 = vmatmul.mubr.f32.gmra.mrb[0].mxu0 %v574
    %v711 = vpop.f32.mrb[0].mxu0
    %v712 = vadd.f32 0.0, %v711
    %v713 = vpop.f32.mrb[0].mxu0
    %v714 = vadd.f32 0.0, %v713
    %715 = vmatprep.mubr.f32.mxu0 0.0
    %716 = vmatmul.mubr.f32.gmra.mrb[0].mxu0 %v575
    %v717 = vpop.f32.mrb[0].mxu0
    %v718 = vadd.f32 0.0, %v717
    %v719 = vpop.f32.mrb[0].mxu0
    %v720 = vadd.f32 0.0, %v719
    %721 = vmatprep.mubr.f32.mxu0 0.0
    %722 = vmatmul.mubr.f32.gmra.mrb[0].mxu0 %v576
    %v723 = vpop.f32.mrb[0].mxu0
    %v724 = vadd.f32 0.0, %v723
    %v725 = vpop.f32.mrb[0].mxu0
    %v726 = vadd.f32 0.0, %v725
    %727 = vmatprep.mubr.f32.mxu0 0.0
    %728 = vmatmul.mubr.f32.gmra.mrb[0].mxu0 %v577
    %v729 = vpop.f32.mrb[0].mxu0
    %v730 = vadd.f32 0.0, %v729
    %v731 = vpop.f32.mrb[0].mxu0
    %v732 = vadd.f32 0.0, %v731
    %733 = vmatprep.mubr.f32.mxu0 0.0
    %734 = vmatmul.mubr.f32.gmra.mrb[0].mxu0 %v578
    %v735 = vpop.f32.mrb[0].mxu0
    %v736 = vadd.f32 0.0, %v735
    %v737 = vpop.f32.mrb[0].mxu0
    %v738 = vadd.f32 0.0, %v737
    %739 = vdwg.mxu0
    %v740 = vld [vmem:[%s6] sm:$0x3]
    %v741 = vsub.f32 1.0, %v740
    %v743 = vlaneseq
    %v744 = vshrl.u32 %v743, 7
    %v745 = vsub.s32 0, %v744
    %v746 = vrot.slane %v740, %v745
    %v747 = vlaneseq
    %v748 = vshrl.u32 %v747, 7
    %v749 = vsub.s32 1, %v748
    %v750 = vrot.slane %v740, %v749
    %v753 = vmul.f32 %v646, %v746
    %v754 = vmul.f32 %v648, %v750
    %v755 = vmul.f32 %v652, %v746
    %v756 = vmul.f32 %v654, %v750
    %v757 = vmul.f32 %v658, %v746
    %v758 = vmul.f32 %v660, %v750
    %v759 = vmul.f32 %v664, %v746
    %v760 = vmul.f32 %v666, %v750
    %v761 = vmul.f32 %v670, %v746
    %v762 = vmul.f32 %v672, %v750
    %v763 = vmul.f32 %v676, %v746
    %v764 = vmul.f32 %v678, %v750
    %v765 = vmul.f32 %v682, %v746
    %v766 = vmul.f32 %v684, %v750
    %v767 = vmul.f32 %v688, %v746
    %v768 = vmul.f32 %v690, %v750
    %v769 = vmul.f32 %v694, %v746
    %v770 = vmul.f32 %v696, %v750
    %v771 = vmul.f32 %v700, %v746
    %v772 = vmul.f32 %v702, %v750
    %v773 = vmul.f32 %v706, %v746
    %v774 = vmul.f32 %v708, %v750
    %v775 = vmul.f32 %v712, %v746
    %v776 = vmul.f32 %v714, %v750
    %v777 = vmul.f32 %v718, %v746
    %v778 = vmul.f32 %v720, %v750
    %v779 = vmul.f32 %v724, %v746
    %v780 = vmul.f32 %v726, %v750
    %v781 = vmul.f32 %v730, %v746
    %v782 = vmul.f32 %v732, %v750
    %v783 = vmul.f32 %v736, %v746
    %v784 = vmul.f32 %v738, %v750
    %v785 = vld [vmem:[%s5] sm:$0xff]
    %v786 = vld [vmem:[%s5 + $0x8] sm:$0xff]
    %v787 = vld [vmem:[%s5 + $0x10] sm:$0xff]
    %v788 = vld [vmem:[%s5 + $0x18] sm:$0xff]
    %v789 = vld [vmem:[%s5 + $0x20] sm:$0xff]
    %v790 = vld [vmem:[%s5 + $0x28] sm:$0xff]
    %v791 = vld [vmem:[%s5 + $0x30] sm:$0xff]
    %v792 = vld [vmem:[%s5 + $0x38] sm:$0xff]
    %v793 = vld [vmem:[%s5 + $0x40] sm:$0xff]
    %v794 = vld [vmem:[%s5 + $0x48] sm:$0xff]
    %v795 = vld [vmem:[%s5 + $0x50] sm:$0xff]
    %v796 = vld [vmem:[%s5 + $0x58] sm:$0xff]
    %v797 = vld [vmem:[%s5 + $0x60] sm:$0xff]
    %v798 = vld [vmem:[%s5 + $0x68] sm:$0xff]
    %v799 = vld [vmem:[%s5 + $0x70] sm:$0xff]
    %v800 = vld [vmem:[%s5 + $0x78] sm:$0xff]
    %v801 = vld [vmem:[%s5 + $0x80] sm:$0xff]
    %v802 = vld [vmem:[%s5 + $0x88] sm:$0xff]
    %v803 = vld [vmem:[%s5 + $0x90] sm:$0xff]
    %v804 = vld [vmem:[%s5 + $0x98] sm:$0xff]
    %v805 = vld [vmem:[%s5 + $0xa0] sm:$0xff]
    %v806 = vld [vmem:[%s5 + $0xa8] sm:$0xff]
    %v807 = vld [vmem:[%s5 + $0xb0] sm:$0xff]
    %v808 = vld [vmem:[%s5 + $0xb8] sm:$0xff]
    %v809 = vld [vmem:[%s5 + $0xc0] sm:$0xff]
    %v810 = vld [vmem:[%s5 + $0xc8] sm:$0xff]
    %v811 = vld [vmem:[%s5 + $0xd0] sm:$0xff]
    %v812 = vld [vmem:[%s5 + $0xd8] sm:$0xff]
    %v813 = vld [vmem:[%s5 + $0xe0] sm:$0xff]
    %v814 = vld [vmem:[%s5 + $0xe8] sm:$0xff]
    %v815 = vld [vmem:[%s5 + $0xf0] sm:$0xff]
    %v816 = vld [vmem:[%s5 + $0xf8] sm:$0xff]
    %v817 = vpack.c.bf16 %v652, %v646
    %v818 = vpack.c.bf16 %v654, %v648
    %v819 = vpack.c.bf16 %v664, %v658
    %v820 = vpack.c.bf16 %v666, %v660
    %v821 = vpack.c.bf16 %v676, %v670
    %v822 = vpack.c.bf16 %v678, %v672
    %v823 = vpack.c.bf16 %v688, %v682
    %v824 = vpack.c.bf16 %v690, %v684
    %v825 = vpack.c.bf16 %v700, %v694
    %v826 = vpack.c.bf16 %v702, %v696
    %v827 = vpack.c.bf16 %v712, %v706
    %v828 = vpack.c.bf16 %v714, %v708
    %v829 = vpack.c.bf16 %v724, %v718
    %v830 = vpack.c.bf16 %v726, %v720
    %v831 = vpack.c.bf16 %v736, %v730
    %v832 = vpack.c.bf16 %v738, %v732
    %v865 = vunpack.c.l.b16 %v785
    %v866 = vunpack.c.h.b16 %v785
    %v867 = vunpack.c.l.b16 %v786
    %v868 = vunpack.c.h.b16 %v786
    %v869 = vunpack.c.l.b16 %v787
    %v870 = vunpack.c.h.b16 %v787
    %v871 = vunpack.c.l.b16 %v788
    %v872 = vunpack.c.h.b16 %v788
    %v873 = vunpack.c.l.b16 %v789
    %v874 = vunpack.c.h.b16 %v789
    %v875 = vunpack.c.l.b16 %v790
    %v876 = vunpack.c.h.b16 %v790
    %v877 = vunpack.c.l.b16 %v791
    %v878 = vunpack.c.h.b16 %v791
    %v879 = vunpack.c.l.b16 %v792
    %v880 = vunpack.c.h.b16 %v792
    %v881 = vunpack.c.l.b16 %v793
    %v882 = vunpack.c.h.b16 %v793
    %v883 = vunpack.c.l.b16 %v794
    %v884 = vunpack.c.h.b16 %v794
    %v885 = vunpack.c.l.b16 %v795
    %v886 = vunpack.c.h.b16 %v795
    %v887 = vunpack.c.l.b16 %v796
    %v888 = vunpack.c.h.b16 %v796
    %v889 = vunpack.c.l.b16 %v797
    %v890 = vunpack.c.h.b16 %v797
    %v891 = vunpack.c.l.b16 %v798
    %v892 = vunpack.c.h.b16 %v798
    %v893 = vunpack.c.l.b16 %v799
    %v894 = vunpack.c.h.b16 %v799
    %v895 = vunpack.c.l.b16 %v800
    %v896 = vunpack.c.h.b16 %v800
    %v897 = vunpack.c.l.b16 %v801
    %v898 = vunpack.c.h.b16 %v801
    %v899 = vunpack.c.l.b16 %v802
    %v900 = vunpack.c.h.b16 %v802
    %v901 = vunpack.c.l.b16 %v803
    %v902 = vunpack.c.h.b16 %v803
    %v903 = vunpack.c.l.b16 %v804
    %v904 = vunpack.c.h.b16 %v804
    %v905 = vunpack.c.l.b16 %v805
    %v906 = vunpack.c.h.b16 %v805
    %v907 = vunpack.c.l.b16 %v806
    %v908 = vunpack.c.h.b16 %v806
    %v909 = vunpack.c.l.b16 %v807
    %v910 = vunpack.c.h.b16 %v807
    %v911 = vunpack.c.l.b16 %v808
    %v912 = vunpack.c.h.b16 %v808
    %v913 = vunpack.c.l.b16 %v809
    %v914 = vunpack.c.h.b16 %v809
    %v915 = vunpack.c.l.b16 %v810
    %v916 = vunpack.c.h.b16 %v810
    %v917 = vunpack.c.l.b16 %v811
    %v918 = vunpack.c.h.b16 %v811
    %v919 = vunpack.c.l.b16 %v812
    %v920 = vunpack.c.h.b16 %v812
    %v921 = vunpack.c.l.b16 %v813
    %v922 = vunpack.c.h.b16 %v813
    %v923 = vunpack.c.l.b16 %v814
    %v924 = vunpack.c.h.b16 %v814
    %v925 = vunpack.c.l.b16 %v815
    %v926 = vunpack.c.h.b16 %v815
    %v927 = vunpack.c.l.b16 %v816
    %v928 = vunpack.c.h.b16 %v816
    %v929 = vpack.c.b16 %v867, %v865
    %v930 = vpack.c.b16 %v868, %v866
    %v931 = vpack.c.b16 %v871, %v869
    %v932 = vpack.c.b16 %v872, %v870
    %v933 = vpack.c.b16 %v875, %v873
    %v934 = vpack.c.b16 %v876, %v874
    %v935 = vpack.c.b16 %v879, %v877
    %v936 = vpack.c.b16 %v880, %v878
    %v937 = vpack.c.b16 %v883, %v881
    %v938 = vpack.c.b16 %v884, %v882
    %v939 = vpack.c.b16 %v887, %v885
    %v940 = vpack.c.b16 %v888, %v886
    %v941 = vpack.c.b16 %v891, %v889
    %v942 = vpack.c.b16 %v892, %v890
    %v943 = vpack.c.b16 %v895, %v893
    %v944 = vpack.c.b16 %v896, %v894
    %v945 = vpack.c.b16 %v899, %v897
    %v946 = vpack.c.b16 %v900, %v898
    %v947 = vpack.c.b16 %v903, %v901
    %v948 = vpack.c.b16 %v904, %v902
    %v949 = vpack.c.b16 %v907, %v905
    %v950 = vpack.c.b16 %v908, %v906
    %v951 = vpack.c.b16 %v911, %v909
    %v952 = vpack.c.b16 %v912, %v910
    %v953 = vpack.c.b16 %v915, %v913
    %v954 = vpack.c.b16 %v916, %v914
    %v955 = vpack.c.b16 %v919, %v917
    %v956 = vpack.c.b16 %v920, %v918
    %v957 = vpack.c.b16 %v923, %v921
    %v958 = vpack.c.b16 %v924, %v922
    %v959 = vpack.c.b16 %v927, %v925
    %v960 = vpack.c.b16 %v928, %v926
    %993 = vmatprep.subr.bf16.mxu0 %v930
    %994 = vmatpush1.bf16.msra.mxu0 %v929
    %995 = vmatprep.subr.bf16.mxu0 %v932
    %996 = vmatpush1.bf16.msra.mxu0 %v931
    %997 = vmatprep.subr.bf16.mxu0 %v934
    %998 = vmatpush1.bf16.msra.mxu0 %v933
    %999 = vmatprep.subr.bf16.mxu0 %v936
    %1000 = vmatpush1.bf16.msra.mxu0 %v935
    %1001 = vmatprep.subr.bf16.mxu0 %v938
    %1002 = vmatpush1.bf16.msra.mxu0 %v937
    %1003 = vmatprep.subr.bf16.mxu0 %v940
    %1004 = vmatpush1.bf16.msra.mxu0 %v939
    %1005 = vmatprep.subr.bf16.mxu0 %v942
    %1006 = vmatpush1.bf16.msra.mxu0 %v941
    %1007 = vmatprep.subr.bf16.mxu0 %v944
    %1008 = vmatpush1.bf16.msra.mxu0 %v943
    %1009 = vmatprep.subr.bf16.mxu0 %v946
    %1010 = vmatpush1.bf16.msra.mxu0 %v945
    %1011 = vmatprep.subr.bf16.mxu0 %v948
    %1012 = vmatpush1.bf16.msra.mxu0 %v947
    %1013 = vmatprep.subr.bf16.mxu0 %v950
    %1014 = vmatpush1.bf16.msra.mxu0 %v949
    %1015 = vmatprep.subr.bf16.mxu0 %v952
    %1016 = vmatpush1.bf16.msra.mxu0 %v951
    %1017 = vmatprep.subr.bf16.mxu0 %v954
    %1018 = vmatpush1.bf16.msra.mxu0 %v953
    %1019 = vmatprep.subr.bf16.mxu0 %v956
    %1020 = vmatpush1.bf16.msra.mxu0 %v955
    %1021 = vmatprep.subr.bf16.mxu0 %v958
    %1022 = vmatpush1.bf16.msra.mxu0 %v957
    %1023 = vmatprep.subr.bf16.mxu0 %v960
    %1024 = vmatpush1.bf16.msra.mxu0 %v959
    %1025 = vmatprep.mubr.bf16.mxu0 %v818
    %1026 = vmatmul.mubr.bf16.gmra.mrb[0].mxu0 %v817
    %v1027 = vpop.f32.mrb[0].mxu0
    %v1028 = vadd.f32 0.0, %v1027
    %v1029 = vpop.f32.mrb[0].mxu0
    %v1030 = vadd.f32 0.0, %v1029
    %v1031 = vpop.f32.mrb[0].mxu0
    %v1032 = vadd.f32 0.0, %v1031
    %v1033 = vpop.f32.mrb[0].mxu0
    %v1034 = vadd.f32 0.0, %v1033
    %1035 = vmatprep.mubr.bf16.mxu0 %v820
    %1036 = vmatmul.mubr.bf16.gmra.mrb[0].mxu0 %v819
    %v1037 = vpop.f32.mrb[0].mxu0
    %v1038 = vadd.f32 0.0, %v1037
    %v1039 = vpop.f32.mrb[0].mxu0
    %v1040 = vadd.f32 0.0, %v1039
    %v1041 = vpop.f32.mrb[0].mxu0
    %v1042 = vadd.f32 0.0, %v1041
    %v1043 = vpop.f32.mrb[0].mxu0
    %v1044 = vadd.f32 0.0, %v1043
    %1045 = vmatprep.mubr.bf16.mxu0 %v822
    %1046 = vmatmul.mubr.bf16.gmra.mrb[0].mxu0 %v821
    %v1047 = vpop.f32.mrb[0].mxu0
    %v1048 = vadd.f32 0.0, %v1047
    %v1049 = vpop.f32.mrb[0].mxu0
    %v1050 = vadd.f32 0.0, %v1049
    %v1051 = vpop.f32.mrb[0].mxu0
    %v1052 = vadd.f32 0.0, %v1051
    %v1053 = vpop.f32.mrb[0].mxu0
    %v1054 = vadd.f32 0.0, %v1053
    %1055 = vmatprep.mubr.bf16.mxu0 %v824
    %1056 = vmatmul.mubr.bf16.gmra.mrb[0].mxu0 %v823
    %v1057 = vpop.f32.mrb[0].mxu0
    %v1058 = vadd.f32 0.0, %v1057
    %v1059 = vpop.f32.mrb[0].mxu0
    %v1060 = vadd.f32 0.0, %v1059
    %v1061 = vpop.f32.mrb[0].mxu0
    %v1062 = vadd.f32 0.0, %v1061
    %v1063 = vpop.f32.mrb[0].mxu0
    %v1064 = vadd.f32 0.0, %v1063
    %1065 = vmatprep.mubr.bf16.mxu0 %v826
    %1066 = vmatmul.mubr.bf16.gmra.mrb[0].mxu0 %v825
    %v1067 = vpop.f32.mrb[0].mxu0
    %v1068 = vadd.f32 0.0, %v1067
    %v1069 = vpop.f32.mrb[0].mxu0
    %v1070 = vadd.f32 0.0, %v1069
    %v1071 = vpop.f32.mrb[0].mxu0
    %v1072 = vadd.f32 0.0, %v1071
    %v1073 = vpop.f32.mrb[0].mxu0
    %v1074 = vadd.f32 0.0, %v1073
    %1075 = vmatprep.mubr.bf16.mxu0 %v828
    %1076 = vmatmul.mubr.bf16.gmra.mrb[0].mxu0 %v827
    %v1077 = vpop.f32.mrb[0].mxu0
    %v1078 = vadd.f32 0.0, %v1077
    %v1079 = vpop.f32.mrb[0].mxu0
    %v1080 = vadd.f32 0.0, %v1079
    %v1081 = vpop.f32.mrb[0].mxu0
    %v1082 = vadd.f32 0.0, %v1081
    %v1083 = vpop.f32.mrb[0].mxu0
    %v1084 = vadd.f32 0.0, %v1083
    %1085 = vmatprep.mubr.bf16.mxu0 %v830
    %1086 = vmatmul.mubr.bf16.gmra.mrb[0].mxu0 %v829
    %v1087 = vpop.f32.mrb[0].mxu0
    %v1088 = vadd.f32 0.0, %v1087
    %v1089 = vpop.f32.mrb[0].mxu0
    %v1090 = vadd.f32 0.0, %v1089
    %v1091 = vpop.f32.mrb[0].mxu0
    %v1092 = vadd.f32 0.0, %v1091
    %v1093 = vpop.f32.mrb[0].mxu0
    %v1094 = vadd.f32 0.0, %v1093
    %1095 = vmatprep.mubr.bf16.mxu0 %v832
    %1096 = vmatmul.mubr.bf16.gmra.mrb[0].mxu0 %v831
    %v1097 = vpop.f32.mrb[0].mxu0
    %v1098 = vadd.f32 0.0, %v1097
    %v1099 = vpop.f32.mrb[0].mxu0
    %v1100 = vadd.f32 0.0, %v1099
    %v1101 = vpop.f32.mrb[0].mxu0
    %v1102 = vadd.f32 0.0, %v1101
    %v1103 = vpop.f32.mrb[0].mxu0
    %v1104 = vadd.f32 0.0, %v1103
    %1105 = vdwg.mxu0
    %v1107 = vlaneseq
    %v1108 = vshrl.u32 %v1107, 7
    %v1109 = vsub.s32 0, %v1108
    %v1110 = vrot.slane %v741, %v1109
    %v1111 = vlaneseq
    %v1112 = vshrl.u32 %v1111, 7
    %v1113 = vsub.s32 1, %v1112
    %v1114 = vrot.slane %v741, %v1113
    %v1117 = vmul.f32 %v646, %v1110
    %v1118 = vmul.f32 %v648, %v1114
    %v1119 = vmul.f32 %v652, %v1110
    %v1120 = vmul.f32 %v654, %v1114
    %v1121 = vmul.f32 %v658, %v1110
    %v1122 = vmul.f32 %v660, %v1114
    %v1123 = vmul.f32 %v664, %v1110
    %v1124 = vmul.f32 %v666, %v1114
    %v1125 = vmul.f32 %v670, %v1110
    %v1126 = vmul.f32 %v672, %v1114
    %v1127 = vmul.f32 %v676, %v1110
    %v1128 = vmul.f32 %v678, %v1114
    %v1129 = vmul.f32 %v682, %v1110
    %v1130 = vmul.f32 %v684, %v1114
    %v1131 = vmul.f32 %v688, %v1110
    %v1132 = vmul.f32 %v690, %v1114
    %v1133 = vmul.f32 %v694, %v1110
    %v1134 = vmul.f32 %v696, %v1114
    %v1135 = vmul.f32 %v700, %v1110
    %v1136 = vmul.f32 %v702, %v1114
    %v1137 = vmul.f32 %v706, %v1110
    %v1138 = vmul.f32 %v708, %v1114
    %v1139 = vmul.f32 %v712, %v1110
    %v1140 = vmul.f32 %v714, %v1114
    %v1141 = vmul.f32 %v718, %v1110
    %v1142 = vmul.f32 %v720, %v1114
    %v1143 = vmul.f32 %v724, %v1110
    %v1144 = vmul.f32 %v726, %v1114
    %v1145 = vmul.f32 %v730, %v1110
    %v1146 = vmul.f32 %v732, %v1114
    %v1147 = vmul.f32 %v736, %v1110
    %v1148 = vmul.f32 %v738, %v1114
    %v1149 = vadd.f32 %v1117, %v753
    %v1150 = vadd.f32 %v1118, %v754
    %v1151 = vadd.f32 %v1119, %v755
    %v1152 = vadd.f32 %v1120, %v756
    %v1153 = vadd.f32 %v1121, %v757
    %v1154 = vadd.f32 %v1122, %v758
    %v1155 = vadd.f32 %v1123, %v759
    %v1156 = vadd.f32 %v1124, %v760
    %v1157 = vadd.f32 %v1125, %v761
    %v1158 = vadd.f32 %v1126, %v762
    %v1159 = vadd.f32 %v1127, %v763
    %v1160 = vadd.f32 %v1128, %v764
    %v1161 = vadd.f32 %v1129, %v765
    %v1162 = vadd.f32 %v1130, %v766
    %v1163 = vadd.f32 %v1131, %v767
    %v1164 = vadd.f32 %v1132, %v768
    %v1165 = vadd.f32 %v1133, %v769
    %v1166 = vadd.f32 %v1134, %v770
    %v1167 = vadd.f32 %v1135, %v771
    %v1168 = vadd.f32 %v1136, %v772
    %v1169 = vadd.f32 %v1137, %v773
    %v1170 = vadd.f32 %v1138, %v774
    %v1171 = vadd.f32 %v1139, %v775
    %v1172 = vadd.f32 %v1140, %v776
    %v1173 = vadd.f32 %v1141, %v777
    %v1174 = vadd.f32 %v1142, %v778
    %v1175 = vadd.f32 %v1143, %v779
    %v1176 = vadd.f32 %v1144, %v780
    %v1177 = vadd.f32 %v1145, %v781
    %v1178 = vadd.f32 %v1146, %v782
    %v1179 = vadd.f32 %v1147, %v783
    %v1180 = vadd.f32 %v1148, %v784
    %v1181 = vadd.f32 %v1149, %v1028
    %v1182 = vadd.f32 %v1150, %v1030
    %v1183 = vadd.f32 %v1151, %v1032
    %v1184 = vadd.f32 %v1152, %v1034
    %v1185 = vadd.f32 %v1153, %v1038
    %v1186 = vadd.f32 %v1154, %v1040
    %v1187 = vadd.f32 %v1155, %v1042
    %v1188 = vadd.f32 %v1156, %v1044
    %v1189 = vadd.f32 %v1157, %v1048
    %v1190 = vadd.f32 %v1158, %v1050
    %v1191 = vadd.f32 %v1159, %v1052
    %v1192 = vadd.f32 %v1160, %v1054
    %v1193 = vadd.f32 %v1161, %v1058
    %v1194 = vadd.f32 %v1162, %v1060
    %v1195 = vadd.f32 %v1163, %v1062
    %v1196 = vadd.f32 %v1164, %v1064
    %v1197 = vadd.f32 %v1165, %v1068
    %v1198 = vadd.f32 %v1166, %v1070
    %v1199 = vadd.f32 %v1167, %v1072
    %v1200 = vadd.f32 %v1168, %v1074
    %v1201 = vadd.f32 %v1169, %v1078
    %v1202 = vadd.f32 %v1170, %v1080
    %v1203 = vadd.f32 %v1171, %v1082
    %v1204 = vadd.f32 %v1172, %v1084
    %v1205 = vadd.f32 %v1173, %v1088
    %v1206 = vadd.f32 %v1174, %v1090
    %v1207 = vadd.f32 %v1175, %v1092
    %v1208 = vadd.f32 %v1176, %v1094
    %v1209 = vadd.f32 %v1177, %v1098
    %v1210 = vadd.f32 %v1178, %v1100
    %v1211 = vadd.f32 %v1179, %v1102
    %v1212 = vadd.f32 %v1180, %v1104
    %v1213 = vpack.c.bf16 %v1183, %v1181
    %v1214 = vpack.c.bf16 %v1184, %v1182
    %v1215 = vpack.c.bf16 %v1187, %v1185
    %v1216 = vpack.c.bf16 %v1188, %v1186
    %v1217 = vpack.c.bf16 %v1191, %v1189
    %v1218 = vpack.c.bf16 %v1192, %v1190
    %v1219 = vpack.c.bf16 %v1195, %v1193
    %v1220 = vpack.c.bf16 %v1196, %v1194
    %v1221 = vpack.c.bf16 %v1199, %v1197
    %v1222 = vpack.c.bf16 %v1200, %v1198
    %v1223 = vpack.c.bf16 %v1203, %v1201
    %v1224 = vpack.c.bf16 %v1204, %v1202
    %v1225 = vpack.c.bf16 %v1207, %v1205
    %v1226 = vpack.c.bf16 %v1208, %v1206
    %v1227 = vpack.c.bf16 %v1211, %v1209
    %v1228 = vpack.c.bf16 %v1212, %v1210
    %1229 = vmatprep.subr.bf16.mxu0 %v930
    %1230 = vmatpush1.bf16.msra.mxu0 %v929
    %1231 = vmatprep.subr.bf16.mxu0 %v932
    %1232 = vmatpush1.bf16.msra.mxu0 %v931
    %1233 = vmatprep.subr.bf16.mxu0 %v934
    %1234 = vmatpush1.bf16.msra.mxu0 %v933
    %1235 = vmatprep.subr.bf16.mxu0 %v936
    %1236 = vmatpush1.bf16.msra.mxu0 %v935
    %1237 = vmatprep.subr.bf16.mxu0 %v938
    %1238 = vmatpush1.bf16.msra.mxu0 %v937
    %1239 = vmatprep.subr.bf16.mxu0 %v940
    %1240 = vmatpush1.bf16.msra.mxu0 %v939
    %1241 = vmatprep.subr.bf16.mxu0 %v942
    %1242 = vmatpush1.bf16.msra.mxu0 %v941
    %1243 = vmatprep.subr.bf16.mxu0 %v944
    %1244 = vmatpush1.bf16.msra.mxu0 %v943
    %1245 = vmatprep.subr.bf16.mxu0 %v946
    %1246 = vmatpush1.bf16.msra.mxu0 %v945
    %1247 = vmatprep.subr.bf16.mxu0 %v948
    %1248 = vmatpush1.bf16.msra.mxu0 %v947
    %1249 = vmatprep.subr.bf16.mxu0 %v950
    %1250 = vmatpush1.bf16.msra.mxu0 %v949
    %1251 = vmatprep.subr.bf16.mxu0 %v952
    %1252 = vmatpush1.bf16.msra.mxu0 %v951
    %1253 = vmatprep.subr.bf16.mxu0 %v954
    %1254 = vmatpush1.bf16.msra.mxu0 %v953
    %1255 = vmatprep.subr.bf16.mxu0 %v956
    %1256 = vmatpush1.bf16.msra.mxu0 %v955
    %1257 = vmatprep.subr.bf16.mxu0 %v958
    %1258 = vmatpush1.bf16.msra.mxu0 %v957
    %1259 = vmatprep.subr.bf16.mxu0 %v960
    %1260 = vmatpush1.bf16.msra.mxu0 %v959
    %1261 = vmatprep.mubr.bf16.mxu0 %v1214
    %1262 = vmatmul.mubr.bf16.gmra.mrb[0].mxu0 %v1213
    %v1263 = vpop.f32.mrb[0].mxu0
    %v1264 = vadd.f32 0.0, %v1263
    %v1265 = vpop.f32.mrb[0].mxu0
    %v1266 = vadd.f32 0.0, %v1265
    %v1267 = vpop.f32.mrb[0].mxu0
    %v1268 = vadd.f32 0.0, %v1267
    %v1269 = vpop.f32.mrb[0].mxu0
    %v1270 = vadd.f32 0.0, %v1269
    %1271 = vmatprep.mubr.bf16.mxu0 %v1216
    %1272 = vmatmul.mubr.bf16.gmra.mrb[0].mxu0 %v1215
    %v1273 = vpop.f32.mrb[0].mxu0
    %v1274 = vadd.f32 0.0, %v1273
    %v1275 = vpop.f32.mrb[0].mxu0
    %v1276 = vadd.f32 0.0, %v1275
    %v1277 = vpop.f32.mrb[0].mxu0
    %v1278 = vadd.f32 0.0, %v1277
    %v1279 = vpop.f32.mrb[0].mxu0
    %v1280 = vadd.f32 0.0, %v1279
    %1281 = vmatprep.mubr.bf16.mxu0 %v1218
    %1282 = vmatmul.mubr.bf16.gmra.mrb[0].mxu0 %v1217
    %v1283 = vpop.f32.mrb[0].mxu0
    %v1284 = vadd.f32 0.0, %v1283
    %v1285 = vpop.f32.mrb[0].mxu0
    %v1286 = vadd.f32 0.0, %v1285
    %v1287 = vpop.f32.mrb[0].mxu0
    %v1288 = vadd.f32 0.0, %v1287
    %v1289 = vpop.f32.mrb[0].mxu0
    %v1290 = vadd.f32 0.0, %v1289
    %1291 = vmatprep.mubr.bf16.mxu0 %v1220
    %1292 = vmatmul.mubr.bf16.gmra.mrb[0].mxu0 %v1219
    %v1293 = vpop.f32.mrb[0].mxu0
    %v1294 = vadd.f32 0.0, %v1293
    %v1295 = vpop.f32.mrb[0].mxu0
    %v1296 = vadd.f32 0.0, %v1295
    %v1297 = vpop.f32.mrb[0].mxu0
    %v1298 = vadd.f32 0.0, %v1297
    %v1299 = vpop.f32.mrb[0].mxu0
    %v1300 = vadd.f32 0.0, %v1299
    %1301 = vmatprep.mubr.bf16.mxu0 %v1222
    %1302 = vmatmul.mubr.bf16.gmra.mrb[0].mxu0 %v1221
    %v1303 = vpop.f32.mrb[0].mxu0
    %v1304 = vadd.f32 0.0, %v1303
    %v1305 = vpop.f32.mrb[0].mxu0
    %v1306 = vadd.f32 0.0, %v1305
    %v1307 = vpop.f32.mrb[0].mxu0
    %v1308 = vadd.f32 0.0, %v1307
    %v1309 = vpop.f32.mrb[0].mxu0
    %v1310 = vadd.f32 0.0, %v1309
    %1311 = vmatprep.mubr.bf16.mxu0 %v1224
    %1312 = vmatmul.mubr.bf16.gmra.mrb[0].mxu0 %v1223
    %v1313 = vpop.f32.mrb[0].mxu0
    %v1314 = vadd.f32 0.0, %v1313
    %v1315 = vpop.f32.mrb[0].mxu0
    %v1316 = vadd.f32 0.0, %v1315
    %v1317 = vpop.f32.mrb[0].mxu0
    %v1318 = vadd.f32 0.0, %v1317
    %v1319 = vpop.f32.mrb[0].mxu0
    %v1320 = vadd.f32 0.0, %v1319
    %1321 = vmatprep.mubr.bf16.mxu0 %v1226
    %1322 = vmatmul.mubr.bf16.gmra.mrb[0].mxu0 %v1225
    %v1323 = vpop.f32.mrb[0].mxu0
    %v1324 = vadd.f32 0.0, %v1323
    %v1325 = vpop.f32.mrb[0].mxu0
    %v1326 = vadd.f32 0.0, %v1325
    %v1327 = vpop.f32.mrb[0].mxu0
    %v1328 = vadd.f32 0.0, %v1327
    %v1329 = vpop.f32.mrb[0].mxu0
    %v1330 = vadd.f32 0.0, %v1329
    %1331 = vmatprep.mubr.bf16.mxu0 %v1228
    %1332 = vmatmul.mubr.bf16.gmra.mrb[0].mxu0 %v1227
    %v1333 = vpop.f32.mrb[0].mxu0
    %v1334 = vadd.f32 0.0, %v1333
    %v1335 = vpop.f32.mrb[0].mxu0
    %v1336 = vadd.f32 0.0, %v1335
    %v1337 = vpop.f32.mrb[0].mxu0
    %v1338 = vadd.f32 0.0, %v1337
    %v1339 = vpop.f32.mrb[0].mxu0
    %v1340 = vadd.f32 0.0, %v1339
    %1341 = vdwg.mxu0
    %v1342 = vmul.f32 %v1181, %v1110
    %v1343 = vmul.f32 %v1182, %v1114
    %v1344 = vmul.f32 %v1183, %v1110
    %v1345 = vmul.f32 %v1184, %v1114
    %v1346 = vmul.f32 %v1185, %v1110
    %v1347 = vmul.f32 %v1186, %v1114
    %v1348 = vmul.f32 %v1187, %v1110
    %v1349 = vmul.f32 %v1188, %v1114
    %v1350 = vmul.f32 %v1189, %v1110
    %v1351 = vmul.f32 %v1190, %v1114
    %v1352 = vmul.f32 %v1191, %v1110
    %v1353 = vmul.f32 %v1192, %v1114
    %v1354 = vmul.f32 %v1193, %v1110
    %v1355 = vmul.f32 %v1194, %v1114
    %v1356 = vmul.f32 %v1195, %v1110
    %v1357 = vmul.f32 %v1196, %v1114
    %v1358 = vmul.f32 %v1197, %v1110
    %v1359 = vmul.f32 %v1198, %v1114
    %v1360 = vmul.f32 %v1199, %v1110
    %v1361 = vmul.f32 %v1200, %v1114
    %v1362 = vmul.f32 %v1201, %v1110
    %v1363 = vmul.f32 %v1202, %v1114
    %v1364 = vmul.f32 %v1203, %v1110
    %v1365 = vmul.f32 %v1204, %v1114
    %v1366 = vmul.f32 %v1205, %v1110
    %v1367 = vmul.f32 %v1206, %v1114
    %v1368 = vmul.f32 %v1207, %v1110
    %v1369 = vmul.f32 %v1208, %v1114
    %v1370 = vmul.f32 %v1209, %v1110
    %v1371 = vmul.f32 %v1210, %v1114
    %v1372 = vmul.f32 %v1211, %v1110
    %v1373 = vmul.f32 %v1212, %v1114
    %v1374 = vadd.f32 %v1342, %v753
    %v1375 = vadd.f32 %v1343, %v754
    %v1376 = vadd.f32 %v1344, %v755
    %v1377 = vadd.f32 %v1345, %v756
    %v1378 = vadd.f32 %v1346, %v757
    %v1379 = vadd.f32 %v1347, %v758
    %v1380 = vadd.f32 %v1348, %v759
    %v1381 = vadd.f32 %v1349, %v760
    %v1382 = vadd.f32 %v1350, %v761
    %v1383 = vadd.f32 %v1351, %v762
    %v1384 = vadd.f32 %v1352, %v763
    %v1385 = vadd.f32 %v1353, %v764
    %v1386 = vadd.f32 %v1354, %v765
    %v1387 = vadd.f32 %v1355, %v766
    %v1388 = vadd.f32 %v1356, %v767
    %v1389 = vadd.f32 %v1357, %v768
    %v1390 = vadd.f32 %v1358, %v769
    %v1391 = vadd.f32 %v1359, %v770
    %v1392 = vadd.f32 %v1360, %v771
    %v1393 = vadd.f32 %v1361, %v772
    %v1394 = vadd.f32 %v1362, %v773
    %v1395 = vadd.f32 %v1363, %v774
    %v1396 = vadd.f32 %v1364, %v775
    %v1397 = vadd.f32 %v1365, %v776
    %v1398 = vadd.f32 %v1366, %v777
    %v1399 = vadd.f32 %v1367, %v778
    %v1400 = vadd.f32 %v1368, %v779
    %v1401 = vadd.f32 %v1369, %v780
    %v1402 = vadd.f32 %v1370, %v781
    %v1403 = vadd.f32 %v1371, %v782
    %v1404 = vadd.f32 %v1372, %v783
    %v1405 = vadd.f32 %v1373, %v784
    %v1406 = vadd.f32 %v1374, %v1264
    %v1407 = vadd.f32 %v1375, %v1266
    %v1408 = vadd.f32 %v1376, %v1268
    %v1409 = vadd.f32 %v1377, %v1270
    %v1410 = vadd.f32 %v1378, %v1274
    %v1411 = vadd.f32 %v1379, %v1276
    %v1412 = vadd.f32 %v1380, %v1278
    %v1413 = vadd.f32 %v1381, %v1280
    %v1414 = vadd.f32 %v1382, %v1284
    %v1415 = vadd.f32 %v1383, %v1286
    %v1416 = vadd.f32 %v1384, %v1288
    %v1417 = vadd.f32 %v1385, %v1290
    %v1418 = vadd.f32 %v1386, %v1294
    %v1419 = vadd.f32 %v1387, %v1296
    %v1420 = vadd.f32 %v1388, %v1298
    %v1421 = vadd.f32 %v1389, %v1300
    %v1422 = vadd.f32 %v1390, %v1304
    %v1423 = vadd.f32 %v1391, %v1306
    %v1424 = vadd.f32 %v1392, %v1308
    %v1425 = vadd.f32 %v1393, %v1310
    %v1426 = vadd.f32 %v1394, %v1314
    %v1427 = vadd.f32 %v1395, %v1316
    %v1428 = vadd.f32 %v1396, %v1318
    %v1429 = vadd.f32 %v1397, %v1320
    %v1430 = vadd.f32 %v1398, %v1324
    %v1431 = vadd.f32 %v1399, %v1326
    %v1432 = vadd.f32 %v1400, %v1328
    %v1433 = vadd.f32 %v1401, %v1330
    %v1434 = vadd.f32 %v1402, %v1334
    %v1435 = vadd.f32 %v1403, %v1336
    %v1436 = vadd.f32 %v1404, %v1338
    %v1437 = vadd.f32 %v1405, %v1340
    %1438 = vst [vmem:[#allocation5] sm:$0xff] %v1406
    %1439 = vst [vmem:[#allocation5 + $0x8] sm:$0xff] %v1407
    %1440 = vst [vmem:[#allocation5 + $0x10] sm:$0xff] %v1408
    %1441 = vst [vmem:[#allocation5 + $0x18] sm:$0xff] %v1409
    %1442 = vst [vmem:[#allocation5 + $0x20] sm:$0xff] %v1410
    %1443 = vst [vmem:[#allocation5 + $0x28] sm:$0xff] %v1411
    %1444 = vst [vmem:[#allocation5 + $0x30] sm:$0xff] %v1412
    %1445 = vst [vmem:[#allocation5 + $0x38] sm:$0xff] %v1413
    %1446 = vst [vmem:[#allocation5 + $0x40] sm:$0xff] %v1414
    %1447 = vst [vmem:[#allocation5 + $0x48] sm:$0xff] %v1415
    %1448 = vst [vmem:[#allocation5 + $0x50] sm:$0xff] %v1416
    %1449 = vst [vmem:[#allocation5 + $0x58] sm:$0xff] %v1417
    %1450 = vst [vmem:[#allocation5 + $0x60] sm:$0xff] %v1418
    %1451 = vst [vmem:[#allocation5 + $0x68] sm:$0xff] %v1419
    %1452 = vst [vmem:[#allocation5 + $0x70] sm:$0xff] %v1420
    %1453 = vst [vmem:[#allocation5 + $0x78] sm:$0xff] %v1421
    %1454 = vst [vmem:[#allocation5 + $0x80] sm:$0xff] %v1422
    %1455 = vst [vmem:[#allocation5 + $0x88] sm:$0xff] %v1423
    %1456 = vst [vmem:[#allocation5 + $0x90] sm:$0xff] %v1424
    %1457 = vst [vmem:[#allocation5 + $0x98] sm:$0xff] %v1425
    %1458 = vst [vmem:[#allocation5 + $0xa0] sm:$0xff] %v1426
    %1459 = vst [vmem:[#allocation5 + $0xa8] sm:$0xff] %v1427
    %1460 = vst [vmem:[#allocation5 + $0xb0] sm:$0xff] %v1428
    %1461 = vst [vmem:[#allocation5 + $0xb8] sm:$0xff] %v1429
    %1462 = vst [vmem:[#allocation5 + $0xc0] sm:$0xff] %v1430
    %1463 = vst [vmem:[#allocation5 + $0xc8] sm:$0xff] %v1431
    %1464 = vst [vmem:[#allocation5 + $0xd0] sm:$0xff] %v1432
    %1465 = vst [vmem:[#allocation5 + $0xd8] sm:$0xff] %v1433
    %1466 = vst [vmem:[#allocation5 + $0xe0] sm:$0xff] %v1434
    %1467 = vst [vmem:[#allocation5 + $0xe8] sm:$0xff] %v1435
    %1468 = vst [vmem:[#allocation5 + $0xf0] sm:$0xff] %v1436
    %1469 = vst [vmem:[#allocation5 + $0xf8] sm:$0xff] %v1437
    // Predicated region
    $region34: #{tpu_custom_call.1} parent=1 // pred_check
      _
    $region35: #{tpu_custom_call.1} parent=1 // pred_check_branch
      %1471 = sbr.rel (0) target = $region37
    $region36: #{tpu_custom_call.1} parent=1 // pred_region
      %s1473 = ssub.s32 4096, 4096
      %1474 = vsyncadd [#allocation4], %s1473
      %s1475 = sshll.u32 [#allocation5], 4
      %s1476 = int_to_ptr.vmem [resolvable:$true] %s1475
      %1481 = dma.vmem_to_hbm [thread:$0]  %s1476, 4096, %s7, [#allocation4], 256, 256, 16
    $region37: #{tpu_custom_call.1} parent=1 // pred_fallthru
      _
    // Predicated region
    $region38: #{tpu_custom_call.1} parent=1 // pred_check
      _
    $region39: #{tpu_custom_call.1} parent=1 // pred_check_branch
      %1483 = sbr.rel (0) target = $region41
    $region40: #{tpu_custom_call.1} parent=1 // pred_region
      %1484 = dma.done [#allocation4], 4096
    $region41: #{tpu_custom_call.1} parent=1 // pred_fallthru
      _
    %1485 = vsyncpa [#allocation3], 1
    %1486 = vsyncpa [#allocation4], 1

</llo_original>
